<compile_context>
chip_gen: v7x
topology: tpu7x:2x2x1
jax: 0.10.0
libtpu: 0.0.40
codegen_flags: <defaults>
</compile_context>

<pallas_src>
import functools

import jax
import jax.numpy as jnp
from jax import lax
from jax.experimental import pallas as pl
from jax.experimental.pallas import tpu as pltpu

_LANE = 128
_NUM_LSTMS = 2


def _round_up(x, m):
    return (x + m - 1) // m * m


# ----------------------------------------------------------------------------
# Fused kernel: embeddings -> two LSTMs (stacked) -> head.
# Gate order matches PyTorch nn.LSTM: [i, f, g, o].
# ----------------------------------------------------------------------------
def _fused_kernel(ids_ref, corr_ids_ref, emb_tbl_ref, frozen_tbl_ref,
                  w_ih_ref, w_hh_ref, b_ref,
                  w1l_ref, w1r_ref, w1c_ref, b1_ref,
                  w2_ref, b2_ref, out_ref, *, seq_len, batch, hidden):
    S, B, H = seq_len, batch, hidden
    V, E = emb_tbl_ref.shape

    # ---- token-embedding lookup for left/right ids, in-kernel, as an exact
    #      one-hot matmul (row selection on the MXU; avoids gather lowering).
    ids = ids_ref[...]                                             # (2*S*B, 1) i32
    onehot = (ids == lax.broadcasted_iota(
        jnp.int32, (_NUM_LSTMS * S * B, V), 1)).astype(jnp.float32)  # (2*S*B, V)
    emb = jnp.dot(onehot, emb_tbl_ref[...],
                  preferred_element_type=jnp.float32)              # (2*S*B, E)
    x = emb.reshape(_NUM_LSTMS, S * B, E)                          # (2, S*B, E)

    # ---- hoist ALL timestep input projections out of the recurrence into one
    #      batched matmul covering both LSTMs.
    x_proj = jnp.einsum("nke,neg->nkg", x, w_ih_ref[...],
                        preferred_element_type=jnp.float32)        # (2, S*B, 4H)

    w_hh = w_hh_ref[...]                                           # (2, H, 4H)
    bias = b_ref[...]                                              # (2, 1, 4H) hoisted

    h = jnp.zeros((_NUM_LSTMS, B, H), jnp.float32)
    c = jnp.zeros((_NUM_LSTMS, B, H), jnp.float32)
    # Static unroll over the small, trace-time-constant sequence length:
    # only the h @ W_hh recurrence remains on the serial dependency chain.
    for t in range(S):
        gates = (x_proj[:, t * B:(t + 1) * B, :]
                 + jnp.einsum("nbh,nhg->nbg", h, w_hh,
                              preferred_element_type=jnp.float32)
                 + bias)                                           # (2, B, 4H)
        i = jax.nn.sigmoid(gates[..., 0 * H:1 * H])
        f = jax.nn.sigmoid(gates[..., 1 * H:2 * H])
        g = jnp.tanh(gates[..., 2 * H:3 * H])
        o = jax.nn.sigmoid(gates[..., 3 * H:4 * H])
        c = f * c + i * g
        h = o * jnp.tanh(c)

    left_h = h[0]                                                  # (B, H) == out[-1]
    right_h = h[1]                                                 # (B, H)

    # ---- frozen-embedding lookup for the corrections (same one-hot trick).
    n_items = frozen_tbl_ref.shape[0]
    cids = corr_ids_ref[...]                                       # (B, 1) i32
    onehot_c = (cids == lax.broadcasted_iota(
        jnp.int32, (B, n_items), 1)).astype(jnp.float32)           # (B, n_items)
    corr = jnp.dot(onehot_c, frozen_tbl_ref[...],
                   preferred_element_type=jnp.float32)             # (B, E)

    # ---- head: fc2(relu(fc1(cat[left, right, corr]))); dropouts are identity.
    #      The concat is expressed as three partial matmuls on a row-split W1.
    hid = (jnp.dot(left_h, w1l_ref[...], preferred_element_type=jnp.float32)
           + jnp.dot(right_h, w1r_ref[...], preferred_element_type=jnp.float32)
           + jnp.dot(corr, w1c_ref[...], preferred_element_type=jnp.float32)
           + b1_ref[...])
    hid = jnp.maximum(hid, 0.0)                                    # nn.ReLU()
    out_ref[...] = (jnp.dot(hid, w2_ref[...],
                            preferred_element_type=jnp.float32)
                    + b2_ref[...])                                 # (B, O_pad), dense store


# ----------------------------------------------------------------------------
# Wrapper: packs the two LSTMs on a leading axis, pads fc2 to a lane-dense
# output width, launches the single fused kernel, slices the result back.
# ----------------------------------------------------------------------------
def w2v_error_model_forward(params, left_ids, right_ids, right_item_ids):
    S, B = left_ids.shape
    H = params["lstm1_w_hh"].shape[0]
    O = params["fc2_w"].shape[1]
    O_pad = _round_up(O, _LANE)

    # Tiny packing ops; fused away under jit.
    ids = (jnp.stack([left_ids, right_ids], axis=0)
           .astype(jnp.int32).reshape(_NUM_LSTMS * S * B, 1))
    corr_ids = right_item_ids.astype(jnp.int32).reshape(B, 1)
    w_ih = jnp.stack([params["lstm1_w_ih"], params["lstm2_w_ih"]], axis=0)  # (2, E, 4H)
    w_hh = jnp.stack([params["lstm1_w_hh"], params["lstm2_w_hh"]], axis=0)  # (2, H, 4H)
    b = jnp.stack([params["lstm1_b"], params["lstm2_b"]], axis=0)           # (2, 1, 4H)
    w2 = jnp.pad(params["fc2_w"], ((0, 0), (0, O_pad - O)))
    b2 = jnp.pad(params["fc2_b"], ((0, 0), (0, O_pad - O)))

    vmem = pl.BlockSpec(memory_space=pltpu.MemorySpace.VMEM)
    kernel = functools.partial(_fused_kernel, seq_len=S, batch=B, hidden=H)
    out_pad = pl.pallas_call(
        kernel,
        out_shape=jax.ShapeDtypeStruct((B, O_pad), jnp.float32),
        in_specs=[vmem] * 13,
        out_specs=vmem,
    )(ids, corr_ids, params["embedding"], params["frozen_embedding"],
      w_ih, w_hh, b,
      params["fc1_w_left"], params["fc1_w_right"], params["fc1_w_corr"],
      params["fc1_b"], w2, b2)
    return out_pad[:, :O]


# ----------------------------------------------------------------------------
# Pure-JAX reference for sanity checking the Pallas kernel.
# ----------------------------------------------------------------------------
def _reference_forward(params, left_ids, right_ids, right_item_ids):
    def run_lstm(x_emb, w_ih, w_hh, b):
        S, B, E = x_emb.shape
        H = w_hh.shape[0]

        def step(carry, x_t):
            h, c = carry
            gates = x_t @ w_ih + h @ w_hh + b
            i = jax.nn.sigmoid(gates[:, 0 * H:1 * H])
            f = jax.nn.sigmoid(gates[:, 1 * H:2 * H])
            g = jnp.tanh(gates[:, 2 * H:3 * H])
            o = jax.nn.sigmoid(gates[:, 3 * H:4 * H])
            c_new = f * c + i * g
            h_new = o * jnp.tanh(c_new)
            return (h_new, c_new), None

        init = (jnp.zeros((B, H), jnp.float32), jnp.zeros((B, H), jnp.float32))
        (h_last, _), _ = jax.lax.scan(step, init, x_emb)
        return h_last

    left_emb = jnp.take(params["embedding"], left_ids, axis=0)
    right_emb = jnp.take(params["embedding"], right_ids, axis=0)
    corr = jnp.take(params["frozen_embedding"], right_item_ids, axis=0)
    lh = run_lstm(left_emb, params["lstm1_w_ih"], params["lstm1_w_hh"], params["lstm1_b"])
    rh = run_lstm(right_emb, params["lstm2_w_ih"], params["lstm2_w_hh"], params["lstm2_b"])
    h = (lh @ params["fc1_w_left"] + rh @ params["fc1_w_right"]
         + corr @ params["fc1_w_corr"] + params["fc1_b"])
    h = jnp.maximum(h, 0.0)
    return h @ params["fc2_w"] + params["fc2_b"]


def init_params(key, vocab_size, embed_size, hidden1, hidden2, output_size):
    ks = jax.random.split(key, 12)
    s = 0.1
    H, E = hidden1, embed_size
    return {
        "embedding": s * jax.random.normal(ks[0], (vocab_size, E), jnp.float32),
        "frozen_embedding": s * jax.random.normal(ks[1], (output_size, E), jnp.float32),
        "lstm1_w_ih": s * jax.random.normal(ks[2], (E, 4 * H), jnp.float32),
        "lstm1_w_hh": s * jax.random.normal(ks[3], (H, 4 * H), jnp.float32),
        "lstm1_b": s * jax.random.normal(ks[4], (1, 4 * H), jnp.float32),  # b_ih + b_hh folded
        "lstm2_w_ih": s * jax.random.normal(ks[5], (E, 4 * H), jnp.float32),
        "lstm2_w_hh": s * jax.random.normal(ks[6], (H, 4 * H), jnp.float32),
        "lstm2_b": s * jax.random.normal(ks[7], (1, 4 * H), jnp.float32),
        # fc1 weight (2H + E, hidden2) split into [left H | right H | corr E] rows
        "fc1_w_left": s * jax.random.normal(ks[8], (H, hidden2), jnp.float32),
        "fc1_w_right": s * jax.random.normal(ks[9], (H, hidden2), jnp.float32),
        "fc1_w_corr": s * jax.random.normal(ks[10], (E, hidden2), jnp.float32),
        "fc1_b": jnp.zeros((1, hidden2), jnp.float32),
        "fc2_w": s * jax.random.normal(ks[11], (hidden2, output_size), jnp.float32),
        "fc2_b": jnp.zeros((1, output_size), jnp.float32),
    }


if __name__ == "__main__":
    vocab_size, embed_size = 64, 32
    hidden1, hidden2, output_size = 32, 32, 16
    seq_len, batch = 8, 8

    key = jax.random.PRNGKey(0)
    k_par, k_l, k_r, k_c = jax.random.split(key, 4)

    params = init_params(k_par, vocab_size, embed_size, hidden1, hidden2, output_size)

    # time-major (S, B) int token ids, like PyTorch batch_first=False
    left_ids = jax.random.randint(k_l, (seq_len, batch), 0, vocab_size, jnp.int32)
    right_ids = jax.random.randint(k_r, (seq_len, batch), 0, vocab_size, jnp.int32)
    right_item_ids = jax.random.randint(k_c, (batch,), 0, output_size, jnp.int32)

    fwd = jax.jit(w2v_error_model_forward)
    out = jax.block_until_ready(fwd(params, left_ids, right_ids, right_item_ids))

    ref = jax.block_until_ready(
        _reference_forward(params, left_ids, right_ids, right_item_ids))

    assert out.shape == (batch, output_size), out.shape
    assert jnp.allclose(out, ref, atol=1e-5, rtol=1e-5), "mismatch vs JAX reference"
    print("KERNEL_OK")
</pallas_src>

<mosaic_0001>
module attributes {stable_mosaic.version = 11 : i64} {
  func.func @_fused_kernel(%arg0: memref<128x1xi32, #tpu.memory_space<vmem>>, %arg1: memref<8x1xi32, #tpu.memory_space<vmem>>, %arg2: memref<64x32xf32, #tpu.memory_space<vmem>>, %arg3: memref<16x32xf32, #tpu.memory_space<vmem>>, %arg4: memref<2x32x128xf32, #tpu.memory_space<vmem>>, %arg5: memref<2x32x128xf32, #tpu.memory_space<vmem>>, %arg6: memref<2x1x128xf32, #tpu.memory_space<vmem>>, %arg7: memref<32x32xf32, #tpu.memory_space<vmem>>, %arg8: memref<32x32xf32, #tpu.memory_space<vmem>>, %arg9: memref<32x32xf32, #tpu.memory_space<vmem>>, %arg10: memref<1x32xf32, #tpu.memory_space<vmem>>, %arg11: memref<32x128xf32, #tpu.memory_space<vmem>>, %arg12: memref<1x128xf32, #tpu.memory_space<vmem>>, %arg13: memref<8x128xf32, #tpu.memory_space<vmem>>) attributes {dimension_semantics = [], scalar_prefetch = 0 : i64, scratch_operands = 0 : i64, tpu.core_type = #tpu.core_type<tc>} {
    %c0 = arith.constant 0 : index
    %c0_0 = arith.constant 0 : index
    %0 = vector.load %arg0[%c0, %c0_0] : memref<128x1xi32, #tpu.memory_space<vmem>>, vector<128x1xi32>
    %1 = tpu.iota {dimensions = array<i32: 1>} : vector<128x64xi32>
    %2 = vector.broadcast %0 : vector<128x1xi32> to vector<128x64xi32>
    %3 = arith.cmpi eq, %2, %1 : vector<128x64xi32>
    %4 = arith.extui %3 : vector<128x64xi1> to vector<128x64xi32>
    %5 = arith.sitofp %4 : vector<128x64xi32> to vector<128x64xf32>
    %c0_1 = arith.constant 0 : index
    %c0_2 = arith.constant 0 : index
    %6 = vector.load %arg2[%c0_1, %c0_2] : memref<64x32xf32, #tpu.memory_space<vmem>>, vector<64x32xf32>
    %cst = arith.constant dense<0.000000e+00> : vector<128x32xf32>
    %7 = tpu.matmul %5, %6, %cst {dimension_numbers = #tpu.dot_dimension_numbers<[1], [0], [0], [1], [0, 0, 1, 1], [], []>} : vector<128x64xf32>, vector<64x32xf32>, vector<128x32xf32> -> vector<128x32xf32>
    %8 = vector.shape_cast %7 : vector<128x32xf32> to vector<2x64x32xf32>
    %c0_3 = arith.constant 0 : index
    %c0_4 = arith.constant 0 : index
    %c0_5 = arith.constant 0 : index
    %9 = vector.load %arg4[%c0_3, %c0_4, %c0_5] : memref<2x32x128xf32, #tpu.memory_space<vmem>>, vector<2x32x128xf32>
    "tpu.trace_start"() <{level = 10 : i32, message = "nke,neg->nkg"}> : () -> ()
    %cst_6 = arith.constant dense<0.000000e+00> : vector<2x64x128xf32>
    %10 = tpu.matmul %8, %9, %cst_6 {dimension_numbers = #tpu.dot_dimension_numbers<[2], [1], [1], [2], [0, 0, 0, 1, 1, 2], [0], [0]>} : vector<2x64x32xf32>, vector<2x32x128xf32>, vector<2x64x128xf32> -> vector<2x64x128xf32>
    "tpu.trace_stop"() : () -> ()
    %c0_7 = arith.constant 0 : index
    %c0_8 = arith.constant 0 : index
    %c0_9 = arith.constant 0 : index
    %11 = vector.load %arg5[%c0_7, %c0_8, %c0_9] : memref<2x32x128xf32, #tpu.memory_space<vmem>>, vector<2x32x128xf32>
    %c0_10 = arith.constant 0 : index
    %c0_11 = arith.constant 0 : index
    %c0_12 = arith.constant 0 : index
    %12 = vector.load %arg6[%c0_10, %c0_11, %c0_12] : memref<2x1x128xf32, #tpu.memory_space<vmem>>, vector<2x1x128xf32>
    %cst_13 = arith.constant 0.000000e+00 : f32
    %13 = vector.broadcast %cst_13 : f32 to vector<2x8x32xf32>
    %cst_14 = arith.constant 0.000000e+00 : f32
    %14 = vector.broadcast %cst_14 : f32 to vector<2x8x32xf32>
    %15 = vector.extract_strided_slice %10 {offsets = [0, 0, 0], sizes = [2, 8, 128], strides = [1, 1, 1]} : vector<2x64x128xf32> to vector<2x8x128xf32>
    "tpu.trace_start"() <{level = 10 : i32, message = "nbh,nhg->nbg"}> : () -> ()
    %cst_15 = arith.constant dense<0.000000e+00> : vector<2x8x128xf32>
    %16 = tpu.matmul %13, %11, %cst_15 {dimension_numbers = #tpu.dot_dimension_numbers<[2], [1], [1], [2], [0, 0, 0, 1, 1, 2], [0], [0]>} : vector<2x8x32xf32>, vector<2x32x128xf32>, vector<2x8x128xf32> -> vector<2x8x128xf32>
    "tpu.trace_stop"() : () -> ()
    %17 = arith.addf %15, %16 : vector<2x8x128xf32>
    %18 = vector.broadcast %12 : vector<2x1x128xf32> to vector<2x8x128xf32>
    %19 = arith.addf %17, %18 : vector<2x8x128xf32>
    %20 = vector.extract_strided_slice %19 {offsets = [0, 0, 0], sizes = [2, 8, 32], strides = [1, 1, 1]} : vector<2x8x128xf32> to vector<2x8x32xf32>
    %21 = arith.negf %20 : vector<2x8x32xf32>
    %22 = math.exp %21 : vector<2x8x32xf32>
    %cst_16 = arith.constant 1.000000e+00 : f32
    %23 = vector.broadcast %cst_16 : f32 to vector<2x8x32xf32>
    %24 = arith.addf %23, %22 : vector<2x8x32xf32>
    %25 = arith.divf %23, %24 : vector<2x8x32xf32>
    %26 = vector.extract_strided_slice %19 {offsets = [0, 0, 32], sizes = [2, 8, 32], strides = [1, 1, 1]} : vector<2x8x128xf32> to vector<2x8x32xf32>
    %27 = arith.negf %26 : vector<2x8x32xf32>
    %28 = math.exp %27 : vector<2x8x32xf32>
    %cst_17 = arith.constant 1.000000e+00 : f32
    %29 = vector.broadcast %cst_17 : f32 to vector<2x8x32xf32>
    %30 = arith.addf %29, %28 : vector<2x8x32xf32>
    %31 = arith.divf %29, %30 : vector<2x8x32xf32>
    %32 = vector.extract_strided_slice %19 {offsets = [0, 0, 64], sizes = [2, 8, 32], strides = [1, 1, 1]} : vector<2x8x128xf32> to vector<2x8x32xf32>
    %33 = math.tanh %32 : vector<2x8x32xf32>
    %34 = vector.extract_strided_slice %19 {offsets = [0, 0, 96], sizes = [2, 8, 32], strides = [1, 1, 1]} : vector<2x8x128xf32> to vector<2x8x32xf32>
    %35 = arith.negf %34 : vector<2x8x32xf32>
    %36 = math.exp %35 : vector<2x8x32xf32>
    %cst_18 = arith.constant 1.000000e+00 : f32
    %37 = vector.broadcast %cst_18 : f32 to vector<2x8x32xf32>
    %38 = arith.addf %37, %36 : vector<2x8x32xf32>
    %39 = arith.divf %37, %38 : vector<2x8x32xf32>
    %40 = arith.mulf %31, %14 : vector<2x8x32xf32>
    %41 = arith.mulf %25, %33 : vector<2x8x32xf32>
    %42 = arith.addf %40, %41 : vector<2x8x32xf32>
    %43 = math.tanh %42 : vector<2x8x32xf32>
    %44 = arith.mulf %39, %43 : vector<2x8x32xf32>
    %45 = vector.extract_strided_slice %10 {offsets = [0, 8, 0], sizes = [2, 8, 128], strides = [1, 1, 1]} : vector<2x64x128xf32> to vector<2x8x128xf32>
    "tpu.trace_start"() <{level = 10 : i32, message = "nbh,nhg->nbg"}> : () -> ()
    %cst_19 = arith.constant dense<0.000000e+00> : vector<2x8x128xf32>
    %46 = tpu.matmul %44, %11, %cst_19 {dimension_numbers = #tpu.dot_dimension_numbers<[2], [1], [1], [2], [0, 0, 0, 1, 1, 2], [0], [0]>} : vector<2x8x32xf32>, vector<2x32x128xf32>, vector<2x8x128xf32> -> vector<2x8x128xf32>
    "tpu.trace_stop"() : () -> ()
    %47 = arith.addf %45, %46 : vector<2x8x128xf32>
    %48 = vector.broadcast %12 : vector<2x1x128xf32> to vector<2x8x128xf32>
    %49 = arith.addf %47, %48 : vector<2x8x128xf32>
    %50 = vector.extract_strided_slice %49 {offsets = [0, 0, 0], sizes = [2, 8, 32], strides = [1, 1, 1]} : vector<2x8x128xf32> to vector<2x8x32xf32>
    %51 = arith.negf %50 : vector<2x8x32xf32>
    %52 = math.exp %51 : vector<2x8x32xf32>
    %cst_20 = arith.constant 1.000000e+00 : f32
    %53 = vector.broadcast %cst_20 : f32 to vector<2x8x32xf32>
    %54 = arith.addf %53, %52 : vector<2x8x32xf32>
    %55 = arith.divf %53, %54 : vector<2x8x32xf32>
    %56 = vector.extract_strided_slice %49 {offsets = [0, 0, 32], sizes = [2, 8, 32], strides = [1, 1, 1]} : vector<2x8x128xf32> to vector<2x8x32xf32>
    %57 = arith.negf %56 : vector<2x8x32xf32>
    %58 = math.exp %57 : vector<2x8x32xf32>
    %cst_21 = arith.constant 1.000000e+00 : f32
    %59 = vector.broadcast %cst_21 : f32 to vector<2x8x32xf32>
    %60 = arith.addf %59, %58 : vector<2x8x32xf32>
    %61 = arith.divf %59, %60 : vector<2x8x32xf32>
    %62 = vector.extract_strided_slice %49 {offsets = [0, 0, 64], sizes = [2, 8, 32], strides = [1, 1, 1]} : vector<2x8x128xf32> to vector<2x8x32xf32>
    %63 = math.tanh %62 : vector<2x8x32xf32>
    %64 = vector.extract_strided_slice %49 {offsets = [0, 0, 96], sizes = [2, 8, 32], strides = [1, 1, 1]} : vector<2x8x128xf32> to vector<2x8x32xf32>
    %65 = arith.negf %64 : vector<2x8x32xf32>
    %66 = math.exp %65 : vector<2x8x32xf32>
    %cst_22 = arith.constant 1.000000e+00 : f32
    %67 = vector.broadcast %cst_22 : f32 to vector<2x8x32xf32>
    %68 = arith.addf %67, %66 : vector<2x8x32xf32>
    %69 = arith.divf %67, %68 : vector<2x8x32xf32>
    %70 = arith.mulf %61, %42 : vector<2x8x32xf32>
    %71 = arith.mulf %55, %63 : vector<2x8x32xf32>
    %72 = arith.addf %70, %71 : vector<2x8x32xf32>
    %73 = math.tanh %72 : vector<2x8x32xf32>
    %74 = arith.mulf %69, %73 : vector<2x8x32xf32>
    %75 = vector.extract_strided_slice %10 {offsets = [0, 16, 0], sizes = [2, 8, 128], strides = [1, 1, 1]} : vector<2x64x128xf32> to vector<2x8x128xf32>
    "tpu.trace_start"() <{level = 10 : i32, message = "nbh,nhg->nbg"}> : () -> ()
    %cst_23 = arith.constant dense<0.000000e+00> : vector<2x8x128xf32>
    %76 = tpu.matmul %74, %11, %cst_23 {dimension_numbers = #tpu.dot_dimension_numbers<[2], [1], [1], [2], [0, 0, 0, 1, 1, 2], [0], [0]>} : vector<2x8x32xf32>, vector<2x32x128xf32>, vector<2x8x128xf32> -> vector<2x8x128xf32>
    "tpu.trace_stop"() : () -> ()
    %77 = arith.addf %75, %76 : vector<2x8x128xf32>
    %78 = vector.broadcast %12 : vector<2x1x128xf32> to vector<2x8x128xf32>
    %79 = arith.addf %77, %78 : vector<2x8x128xf32>
    %80 = vector.extract_strided_slice %79 {offsets = [0, 0, 0], sizes = [2, 8, 32], strides = [1, 1, 1]} : vector<2x8x128xf32> to vector<2x8x32xf32>
    %81 = arith.negf %80 : vector<2x8x32xf32>
    %82 = math.exp %81 : vector<2x8x32xf32>
    %cst_24 = arith.constant 1.000000e+00 : f32
    %83 = vector.broadcast %cst_24 : f32 to vector<2x8x32xf32>
    %84 = arith.addf %83, %82 : vector<2x8x32xf32>
    %85 = arith.divf %83, %84 : vector<2x8x32xf32>
    %86 = vector.extract_strided_slice %79 {offsets = [0, 0, 32], sizes = [2, 8, 32], strides = [1, 1, 1]} : vector<2x8x128xf32> to vector<2x8x32xf32>
    %87 = arith.negf %86 : vector<2x8x32xf32>
    %88 = math.exp %87 : vector<2x8x32xf32>
    %cst_25 = arith.constant 1.000000e+00 : f32
    %89 = vector.broadcast %cst_25 : f32 to vector<2x8x32xf32>
    %90 = arith.addf %89, %88 : vector<2x8x32xf32>
    %91 = arith.divf %89, %90 : vector<2x8x32xf32>
    %92 = vector.extract_strided_slice %79 {offsets = [0, 0, 64], sizes = [2, 8, 32], strides = [1, 1, 1]} : vector<2x8x128xf32> to vector<2x8x32xf32>
    %93 = math.tanh %92 : vector<2x8x32xf32>
    %94 = vector.extract_strided_slice %79 {offsets = [0, 0, 96], sizes = [2, 8, 32], strides = [1, 1, 1]} : vector<2x8x128xf32> to vector<2x8x32xf32>
    %95 = arith.negf %94 : vector<2x8x32xf32>
    %96 = math.exp %95 : vector<2x8x32xf32>
    %cst_26 = arith.constant 1.000000e+00 : f32
    %97 = vector.broadcast %cst_26 : f32 to vector<2x8x32xf32>
    %98 = arith.addf %97, %96 : vector<2x8x32xf32>
    %99 = arith.divf %97, %98 : vector<2x8x32xf32>
    %100 = arith.mulf %91, %72 : vector<2x8x32xf32>
    %101 = arith.mulf %85, %93 : vector<2x8x32xf32>
    %102 = arith.addf %100, %101 : vector<2x8x32xf32>
    %103 = math.tanh %102 : vector<2x8x32xf32>
    %104 = arith.mulf %99, %103 : vector<2x8x32xf32>
    %105 = vector.extract_strided_slice %10 {offsets = [0, 24, 0], sizes = [2, 8, 128], strides = [1, 1, 1]} : vector<2x64x128xf32> to vector<2x8x128xf32>
    "tpu.trace_start"() <{level = 10 : i32, message = "nbh,nhg->nbg"}> : () -> ()
    %cst_27 = arith.constant dense<0.000000e+00> : vector<2x8x128xf32>
    %106 = tpu.matmul %104, %11, %cst_27 {dimension_numbers = #tpu.dot_dimension_numbers<[2], [1], [1], [2], [0, 0, 0, 1, 1, 2], [0], [0]>} : vector<2x8x32xf32>, vector<2x32x128xf32>, vector<2x8x128xf32> -> vector<2x8x128xf32>
    "tpu.trace_stop"() : () -> ()
    %107 = arith.addf %105, %106 : vector<2x8x128xf32>
    %108 = vector.broadcast %12 : vector<2x1x128xf32> to vector<2x8x128xf32>
    %109 = arith.addf %107, %108 : vector<2x8x128xf32>
    %110 = vector.extract_strided_slice %109 {offsets = [0, 0, 0], sizes = [2, 8, 32], strides = [1, 1, 1]} : vector<2x8x128xf32> to vector<2x8x32xf32>
    %111 = arith.negf %110 : vector<2x8x32xf32>
    %112 = math.exp %111 : vector<2x8x32xf32>
    %cst_28 = arith.constant 1.000000e+00 : f32
    %113 = vector.broadcast %cst_28 : f32 to vector<2x8x32xf32>
    %114 = arith.addf %113, %112 : vector<2x8x32xf32>
    %115 = arith.divf %113, %114 : vector<2x8x32xf32>
    %116 = vector.extract_strided_slice %109 {offsets = [0, 0, 32], sizes = [2, 8, 32], strides = [1, 1, 1]} : vector<2x8x128xf32> to vector<2x8x32xf32>
    %117 = arith.negf %116 : vector<2x8x32xf32>
    %118 = math.exp %117 : vector<2x8x32xf32>
    %cst_29 = arith.constant 1.000000e+00 : f32
    %119 = vector.broadcast %cst_29 : f32 to vector<2x8x32xf32>
    %120 = arith.addf %119, %118 : vector<2x8x32xf32>
    %121 = arith.divf %119, %120 : vector<2x8x32xf32>
    %122 = vector.extract_strided_slice %109 {offsets = [0, 0, 64], sizes = [2, 8, 32], strides = [1, 1, 1]} : vector<2x8x128xf32> to vector<2x8x32xf32>
    %123 = math.tanh %122 : vector<2x8x32xf32>
    %124 = vector.extract_strided_slice %109 {offsets = [0, 0, 96], sizes = [2, 8, 32], strides = [1, 1, 1]} : vector<2x8x128xf32> to vector<2x8x32xf32>
    %125 = arith.negf %124 : vector<2x8x32xf32>
    %126 = math.exp %125 : vector<2x8x32xf32>
    %cst_30 = arith.constant 1.000000e+00 : f32
    %127 = vector.broadcast %cst_30 : f32 to vector<2x8x32xf32>
    %128 = arith.addf %127, %126 : vector<2x8x32xf32>
    %129 = arith.divf %127, %128 : vector<2x8x32xf32>
    %130 = arith.mulf %121, %102 : vector<2x8x32xf32>
    %131 = arith.mulf %115, %123 : vector<2x8x32xf32>
    %132 = arith.addf %130, %131 : vector<2x8x32xf32>
    %133 = math.tanh %132 : vector<2x8x32xf32>
    %134 = arith.mulf %129, %133 : vector<2x8x32xf32>
    %135 = vector.extract_strided_slice %10 {offsets = [0, 32, 0], sizes = [2, 8, 128], strides = [1, 1, 1]} : vector<2x64x128xf32> to vector<2x8x128xf32>
    "tpu.trace_start"() <{level = 10 : i32, message = "nbh,nhg->nbg"}> : () -> ()
    %cst_31 = arith.constant dense<0.000000e+00> : vector<2x8x128xf32>
    %136 = tpu.matmul %134, %11, %cst_31 {dimension_numbers = #tpu.dot_dimension_numbers<[2], [1], [1], [2], [0, 0, 0, 1, 1, 2], [0], [0]>} : vector<2x8x32xf32>, vector<2x32x128xf32>, vector<2x8x128xf32> -> vector<2x8x128xf32>
    "tpu.trace_stop"() : () -> ()
    %137 = arith.addf %135, %136 : vector<2x8x128xf32>
    %138 = vector.broadcast %12 : vector<2x1x128xf32> to vector<2x8x128xf32>
    %139 = arith.addf %137, %138 : vector<2x8x128xf32>
    %140 = vector.extract_strided_slice %139 {offsets = [0, 0, 0], sizes = [2, 8, 32], strides = [1, 1, 1]} : vector<2x8x128xf32> to vector<2x8x32xf32>
    %141 = arith.negf %140 : vector<2x8x32xf32>
    %142 = math.exp %141 : vector<2x8x32xf32>
    %cst_32 = arith.constant 1.000000e+00 : f32
    %143 = vector.broadcast %cst_32 : f32 to vector<2x8x32xf32>
    %144 = arith.addf %143, %142 : vector<2x8x32xf32>
    %145 = arith.divf %143, %144 : vector<2x8x32xf32>
    %146 = vector.extract_strided_slice %139 {offsets = [0, 0, 32], sizes = [2, 8, 32], strides = [1, 1, 1]} : vector<2x8x128xf32> to vector<2x8x32xf32>
    %147 = arith.negf %146 : vector<2x8x32xf32>
    %148 = math.exp %147 : vector<2x8x32xf32>
    %cst_33 = arith.constant 1.000000e+00 : f32
    %149 = vector.broadcast %cst_33 : f32 to vector<2x8x32xf32>
    %150 = arith.addf %149, %148 : vector<2x8x32xf32>
    %151 = arith.divf %149, %150 : vector<2x8x32xf32>
    %152 = vector.extract_strided_slice %139 {offsets = [0, 0, 64], sizes = [2, 8, 32], strides = [1, 1, 1]} : vector<2x8x128xf32> to vector<2x8x32xf32>
    %153 = math.tanh %152 : vector<2x8x32xf32>
    %154 = vector.extract_strided_slice %139 {offsets = [0, 0, 96], sizes = [2, 8, 32], strides = [1, 1, 1]} : vector<2x8x128xf32> to vector<2x8x32xf32>
    %155 = arith.negf %154 : vector<2x8x32xf32>
    %156 = math.exp %155 : vector<2x8x32xf32>
    %cst_34 = arith.constant 1.000000e+00 : f32
    %157 = vector.broadcast %cst_34 : f32 to vector<2x8x32xf32>
    %158 = arith.addf %157, %156 : vector<2x8x32xf32>
    %159 = arith.divf %157, %158 : vector<2x8x32xf32>
    %160 = arith.mulf %151, %132 : vector<2x8x32xf32>
    %161 = arith.mulf %145, %153 : vector<2x8x32xf32>
    %162 = arith.addf %160, %161 : vector<2x8x32xf32>
    %163 = math.tanh %162 : vector<2x8x32xf32>
    %164 = arith.mulf %159, %163 : vector<2x8x32xf32>
    %165 = vector.extract_strided_slice %10 {offsets = [0, 40, 0], sizes = [2, 8, 128], strides = [1, 1, 1]} : vector<2x64x128xf32> to vector<2x8x128xf32>
    "tpu.trace_start"() <{level = 10 : i32, message = "nbh,nhg->nbg"}> : () -> ()
    %cst_35 = arith.constant dense<0.000000e+00> : vector<2x8x128xf32>
    %166 = tpu.matmul %164, %11, %cst_35 {dimension_numbers = #tpu.dot_dimension_numbers<[2], [1], [1], [2], [0, 0, 0, 1, 1, 2], [0], [0]>} : vector<2x8x32xf32>, vector<2x32x128xf32>, vector<2x8x128xf32> -> vector<2x8x128xf32>
    "tpu.trace_stop"() : () -> ()
    %167 = arith.addf %165, %166 : vector<2x8x128xf32>
    %168 = vector.broadcast %12 : vector<2x1x128xf32> to vector<2x8x128xf32>
    %169 = arith.addf %167, %168 : vector<2x8x128xf32>
    %170 = vector.extract_strided_slice %169 {offsets = [0, 0, 0], sizes = [2, 8, 32], strides = [1, 1, 1]} : vector<2x8x128xf32> to vector<2x8x32xf32>
    %171 = arith.negf %170 : vector<2x8x32xf32>
    %172 = math.exp %171 : vector<2x8x32xf32>
    %cst_36 = arith.constant 1.000000e+00 : f32
    %173 = vector.broadcast %cst_36 : f32 to vector<2x8x32xf32>
    %174 = arith.addf %173, %172 : vector<2x8x32xf32>
    %175 = arith.divf %173, %174 : vector<2x8x32xf32>
    %176 = vector.extract_strided_slice %169 {offsets = [0, 0, 32], sizes = [2, 8, 32], strides = [1, 1, 1]} : vector<2x8x128xf32> to vector<2x8x32xf32>
    %177 = arith.negf %176 : vector<2x8x32xf32>
    %178 = math.exp %177 : vector<2x8x32xf32>
    %cst_37 = arith.constant 1.000000e+00 : f32
    %179 = vector.broadcast %cst_37 : f32 to vector<2x8x32xf32>
    %180 = arith.addf %179, %178 : vector<2x8x32xf32>
    %181 = arith.divf %179, %180 : vector<2x8x32xf32>
    %182 = vector.extract_strided_slice %169 {offsets = [0, 0, 64], sizes = [2, 8, 32], strides = [1, 1, 1]} : vector<2x8x128xf32> to vector<2x8x32xf32>
    %183 = math.tanh %182 : vector<2x8x32xf32>
    %184 = vector.extract_strided_slice %169 {offsets = [0, 0, 96], sizes = [2, 8, 32], strides = [1, 1, 1]} : vector<2x8x128xf32> to vector<2x8x32xf32>
    %185 = arith.negf %184 : vector<2x8x32xf32>
    %186 = math.exp %185 : vector<2x8x32xf32>
    %cst_38 = arith.constant 1.000000e+00 : f32
    %187 = vector.broadcast %cst_38 : f32 to vector<2x8x32xf32>
    %188 = arith.addf %187, %186 : vector<2x8x32xf32>
    %189 = arith.divf %187, %188 : vector<2x8x32xf32>
    %190 = arith.mulf %181, %162 : vector<2x8x32xf32>
    %191 = arith.mulf %175, %183 : vector<2x8x32xf32>
    %192 = arith.addf %190, %191 : vector<2x8x32xf32>
    %193 = math.tanh %192 : vector<2x8x32xf32>
    %194 = arith.mulf %189, %193 : vector<2x8x32xf32>
    %195 = vector.extract_strided_slice %10 {offsets = [0, 48, 0], sizes = [2, 8, 128], strides = [1, 1, 1]} : vector<2x64x128xf32> to vector<2x8x128xf32>
    "tpu.trace_start"() <{level = 10 : i32, message = "nbh,nhg->nbg"}> : () -> ()
    %cst_39 = arith.constant dense<0.000000e+00> : vector<2x8x128xf32>
    %196 = tpu.matmul %194, %11, %cst_39 {dimension_numbers = #tpu.dot_dimension_numbers<[2], [1], [1], [2], [0, 0, 0, 1, 1, 2], [0], [0]>} : vector<2x8x32xf32>, vector<2x32x128xf32>, vector<2x8x128xf32> -> vector<2x8x128xf32>
    "tpu.trace_stop"() : () -> ()
    %197 = arith.addf %195, %196 : vector<2x8x128xf32>
    %198 = vector.broadcast %12 : vector<2x1x128xf32> to vector<2x8x128xf32>
    %199 = arith.addf %197, %198 : vector<2x8x128xf32>
    %200 = vector.extract_strided_slice %199 {offsets = [0, 0, 0], sizes = [2, 8, 32], strides = [1, 1, 1]} : vector<2x8x128xf32> to vector<2x8x32xf32>
    %201 = arith.negf %200 : vector<2x8x32xf32>
    %202 = math.exp %201 : vector<2x8x32xf32>
    %cst_40 = arith.constant 1.000000e+00 : f32
    %203 = vector.broadcast %cst_40 : f32 to vector<2x8x32xf32>
    %204 = arith.addf %203, %202 : vector<2x8x32xf32>
    %205 = arith.divf %203, %204 : vector<2x8x32xf32>
    %206 = vector.extract_strided_slice %199 {offsets = [0, 0, 32], sizes = [2, 8, 32], strides = [1, 1, 1]} : vector<2x8x128xf32> to vector<2x8x32xf32>
    %207 = arith.negf %206 : vector<2x8x32xf32>
    %208 = math.exp %207 : vector<2x8x32xf32>
    %cst_41 = arith.constant 1.000000e+00 : f32
    %209 = vector.broadcast %cst_41 : f32 to vector<2x8x32xf32>
    %210 = arith.addf %209, %208 : vector<2x8x32xf32>
    %211 = arith.divf %209, %210 : vector<2x8x32xf32>
    %212 = vector.extract_strided_slice %199 {offsets = [0, 0, 64], sizes = [2, 8, 32], strides = [1, 1, 1]} : vector<2x8x128xf32> to vector<2x8x32xf32>
    %213 = math.tanh %212 : vector<2x8x32xf32>
    %214 = vector.extract_strided_slice %199 {offsets = [0, 0, 96], sizes = [2, 8, 32], strides = [1, 1, 1]} : vector<2x8x128xf32> to vector<2x8x32xf32>
    %215 = arith.negf %214 : vector<2x8x32xf32>
    %216 = math.exp %215 : vector<2x8x32xf32>
    %cst_42 = arith.constant 1.000000e+00 : f32
    %217 = vector.broadcast %cst_42 : f32 to vector<2x8x32xf32>
    %218 = arith.addf %217, %216 : vector<2x8x32xf32>
    %219 = arith.divf %217, %218 : vector<2x8x32xf32>
    %220 = arith.mulf %211, %192 : vector<2x8x32xf32>
    %221 = arith.mulf %205, %213 : vector<2x8x32xf32>
    %222 = arith.addf %220, %221 : vector<2x8x32xf32>
    %223 = math.tanh %222 : vector<2x8x32xf32>
    %224 = arith.mulf %219, %223 : vector<2x8x32xf32>
    %225 = vector.extract_strided_slice %10 {offsets = [0, 56, 0], sizes = [2, 8, 128], strides = [1, 1, 1]} : vector<2x64x128xf32> to vector<2x8x128xf32>
    "tpu.trace_start"() <{level = 10 : i32, message = "nbh,nhg->nbg"}> : () -> ()
    %cst_43 = arith.constant dense<0.000000e+00> : vector<2x8x128xf32>
    %226 = tpu.matmul %224, %11, %cst_43 {dimension_numbers = #tpu.dot_dimension_numbers<[2], [1], [1], [2], [0, 0, 0, 1, 1, 2], [0], [0]>} : vector<2x8x32xf32>, vector<2x32x128xf32>, vector<2x8x128xf32> -> vector<2x8x128xf32>
    "tpu.trace_stop"() : () -> ()
    %227 = arith.addf %225, %226 : vector<2x8x128xf32>
    %228 = vector.broadcast %12 : vector<2x1x128xf32> to vector<2x8x128xf32>
    %229 = arith.addf %227, %228 : vector<2x8x128xf32>
    %230 = vector.extract_strided_slice %229 {offsets = [0, 0, 0], sizes = [2, 8, 32], strides = [1, 1, 1]} : vector<2x8x128xf32> to vector<2x8x32xf32>
    %231 = arith.negf %230 : vector<2x8x32xf32>
    %232 = math.exp %231 : vector<2x8x32xf32>
    %cst_44 = arith.constant 1.000000e+00 : f32
    %233 = vector.broadcast %cst_44 : f32 to vector<2x8x32xf32>
    %234 = arith.addf %233, %232 : vector<2x8x32xf32>
    %235 = arith.divf %233, %234 : vector<2x8x32xf32>
    %236 = vector.extract_strided_slice %229 {offsets = [0, 0, 32], sizes = [2, 8, 32], strides = [1, 1, 1]} : vector<2x8x128xf32> to vector<2x8x32xf32>
    %237 = arith.negf %236 : vector<2x8x32xf32>
    %238 = math.exp %237 : vector<2x8x32xf32>
    %cst_45 = arith.constant 1.000000e+00 : f32
    %239 = vector.broadcast %cst_45 : f32 to vector<2x8x32xf32>
    %240 = arith.addf %239, %238 : vector<2x8x32xf32>
    %241 = arith.divf %239, %240 : vector<2x8x32xf32>
    %242 = vector.extract_strided_slice %229 {offsets = [0, 0, 64], sizes = [2, 8, 32], strides = [1, 1, 1]} : vector<2x8x128xf32> to vector<2x8x32xf32>
    %243 = math.tanh %242 : vector<2x8x32xf32>
    %244 = vector.extract_strided_slice %229 {offsets = [0, 0, 96], sizes = [2, 8, 32], strides = [1, 1, 1]} : vector<2x8x128xf32> to vector<2x8x32xf32>
    %245 = arith.negf %244 : vector<2x8x32xf32>
    %246 = math.exp %245 : vector<2x8x32xf32>
    %cst_46 = arith.constant 1.000000e+00 : f32
    %247 = vector.broadcast %cst_46 : f32 to vector<2x8x32xf32>
    %248 = arith.addf %247, %246 : vector<2x8x32xf32>
    %249 = arith.divf %247, %248 : vector<2x8x32xf32>
    %250 = arith.mulf %241, %222 : vector<2x8x32xf32>
    %251 = arith.mulf %235, %243 : vector<2x8x32xf32>
    %252 = arith.addf %250, %251 : vector<2x8x32xf32>
    %253 = math.tanh %252 : vector<2x8x32xf32>
    %254 = arith.mulf %249, %253 : vector<2x8x32xf32>
    %255 = vector.extract_strided_slice %254 {offsets = [0, 0, 0], sizes = [1, 8, 32], strides = [1, 1, 1]} : vector<2x8x32xf32> to vector<1x8x32xf32>
    %256 = vector.shape_cast %255 : vector<1x8x32xf32> to vector<8x32xf32>
    %257 = vector.extract_strided_slice %254 {offsets = [1, 0, 0], sizes = [1, 8, 32], strides = [1, 1, 1]} : vector<2x8x32xf32> to vector<1x8x32xf32>
    %258 = vector.shape_cast %257 : vector<1x8x32xf32> to vector<8x32xf32>
    %c0_47 = arith.constant 0 : index
    %c0_48 = arith.constant 0 : index
    %259 = vector.load %arg1[%c0_47, %c0_48] : memref<8x1xi32, #tpu.memory_space<vmem>>, vector<8x1xi32>
    %260 = tpu.iota {dimensions = array<i32: 1>} : vector<8x16xi32>
    %261 = vector.broadcast %259 : vector<8x1xi32> to vector<8x16xi32>
    %262 = arith.cmpi eq, %261, %260 : vector<8x16xi32>
    %263 = arith.extui %262 : vector<8x16xi1> to vector<8x16xi32>
    %264 = arith.sitofp %263 : vector<8x16xi32> to vector<8x16xf32>
    %c0_49 = arith.constant 0 : index
    %c0_50 = arith.constant 0 : index
    %265 = vector.load %arg3[%c0_49, %c0_50] : memref<16x32xf32, #tpu.memory_space<vmem>>, vector<16x32xf32>
    %cst_51 = arith.constant dense<0.000000e+00> : vector<8x32xf32>
    %266 = tpu.matmul %264, %265, %cst_51 {dimension_numbers = #tpu.dot_dimension_numbers<[1], [0], [0], [1], [0, 0, 1, 1], [], []>} : vector<8x16xf32>, vector<16x32xf32>, vector<8x32xf32> -> vector<8x32xf32>
    %c0_52 = arith.constant 0 : index
    %c0_53 = arith.constant 0 : index
    %267 = vector.load %arg7[%c0_52, %c0_53] : memref<32x32xf32, #tpu.memory_space<vmem>>, vector<32x32xf32>
    %cst_54 = arith.constant dense<0.000000e+00> : vector<8x32xf32>
    %268 = tpu.matmul %256, %267, %cst_54 {dimension_numbers = #tpu.dot_dimension_numbers<[1], [0], [0], [1], [0, 0, 1, 1], [], []>} : vector<8x32xf32>, vector<32x32xf32>, vector<8x32xf32> -> vector<8x32xf32>
    %c0_55 = arith.constant 0 : index
    %c0_56 = arith.constant 0 : index
    %269 = vector.load %arg8[%c0_55, %c0_56] : memref<32x32xf32, #tpu.memory_space<vmem>>, vector<32x32xf32>
    %cst_57 = arith.constant dense<0.000000e+00> : vector<8x32xf32>
    %270 = tpu.matmul %258, %269, %cst_57 {dimension_numbers = #tpu.dot_dimension_numbers<[1], [0], [0], [1], [0, 0, 1, 1], [], []>} : vector<8x32xf32>, vector<32x32xf32>, vector<8x32xf32> -> vector<8x32xf32>
    %271 = arith.addf %268, %270 : vector<8x32xf32>
    %c0_58 = arith.constant 0 : index
    %c0_59 = arith.constant 0 : index
    %272 = vector.load %arg9[%c0_58, %c0_59] : memref<32x32xf32, #tpu.memory_space<vmem>>, vector<32x32xf32>
    %cst_60 = arith.constant dense<0.000000e+00> : vector<8x32xf32>
    %273 = tpu.matmul %266, %272, %cst_60 {dimension_numbers = #tpu.dot_dimension_numbers<[1], [0], [0], [1], [0, 0, 1, 1], [], []>} : vector<8x32xf32>, vector<32x32xf32>, vector<8x32xf32> -> vector<8x32xf32>
    %274 = arith.addf %271, %273 : vector<8x32xf32>
    %c0_61 = arith.constant 0 : index
    %c0_62 = arith.constant 0 : index
    %275 = vector.load %arg10[%c0_61, %c0_62] : memref<1x32xf32, #tpu.memory_space<vmem>>, vector<1x32xf32>
    %276 = vector.broadcast %275 : vector<1x32xf32> to vector<8x32xf32>
    %277 = arith.addf %274, %276 : vector<8x32xf32>
    %cst_63 = arith.constant 0.000000e+00 : f32
    %278 = vector.broadcast %cst_63 : f32 to vector<8x32xf32>
    %279 = arith.maximumf %277, %278 : vector<8x32xf32>
    %c0_64 = arith.constant 0 : index
    %c0_65 = arith.constant 0 : index
    %280 = vector.load %arg11[%c0_64, %c0_65] : memref<32x128xf32, #tpu.memory_space<vmem>>, vector<32x128xf32>
    %cst_66 = arith.constant dense<0.000000e+00> : vector<8x128xf32>
    %281 = tpu.matmul %279, %280, %cst_66 {dimension_numbers = #tpu.dot_dimension_numbers<[1], [0], [0], [1], [0, 0, 1, 1], [], []>} : vector<8x32xf32>, vector<32x128xf32>, vector<8x128xf32> -> vector<8x128xf32>
    %c0_67 = arith.constant 0 : index
    %c0_68 = arith.constant 0 : index
    %282 = vector.load %arg12[%c0_67, %c0_68] : memref<1x128xf32, #tpu.memory_space<vmem>>, vector<1x128xf32>
    %283 = vector.broadcast %282 : vector<1x128xf32> to vector<8x128xf32>
    %284 = arith.addf %281, %283 : vector<8x128xf32>
    %c0_69 = arith.constant 0 : index
    %c0_70 = arith.constant 0 : index
    %285 = vector.load %arg13[%c0_69, %c0_70] : memref<8x128xf32, #tpu.memory_space<vmem>>, vector<8x128xf32>
    tpu.vector_store %arg13[%c0_69, %c0_70], %284 {strides = array<i32>} : memref<8x128xf32, #tpu.memory_space<vmem>>, vector<8x128xf32>,
    return
  }
}

</mosaic_0001>

<llo_original>
// kernel: w2v_error_model_forward.1
$region0: #{w2v_error_model_forward.1}
  #allocation0 [shape = 'u32[]', space=smem, size = 0x4, offset = 0x4, fixed_abs, tag = 'smem constant byte address 0x4 - core index']
  #allocation1 [shape = 'u32[144,128]{1,0:T(1,128)}', space=vmem, size = 0x12000, scoped, tag = 'internal scratch']
  %s0 = inlined_call_operand.vmem [shape: s32[128,1], index: 0, kind: input, shape index: {}]
  %s1 = inlined_call_operand.vmem [shape: s32[8,1], index: 1, kind: input, shape index: {}]
  %s2 = inlined_call_operand.vmem [shape: f32[64,32], index: 2, kind: input, shape index: {}]
  %s3 = inlined_call_operand.vmem [shape: f32[16,32], index: 3, kind: input, shape index: {}]
  %s4 = inlined_call_operand.vmem [shape: f32[2,32,128], index: 4, kind: input, shape index: {}]
  %s5 = inlined_call_operand.vmem [shape: f32[2,32,128], index: 5, kind: input, shape index: {}]
  %s6 = inlined_call_operand.vmem [shape: f32[2,1,128], index: 6, kind: input, shape index: {}]
  %s7 = inlined_call_operand.vmem [shape: f32[32,32], index: 7, kind: input, shape index: {}]
  %s8 = inlined_call_operand.vmem [shape: f32[32,32], index: 8, kind: input, shape index: {}]
  %s9 = inlined_call_operand.vmem [shape: f32[32,32], index: 9, kind: input, shape index: {}]
  %s10 = inlined_call_operand.vmem [shape: f32[1,32], index: 10, kind: input, shape index: {}]
  %s11 = inlined_call_operand.vmem [shape: f32[32,128], index: 11, kind: input, shape index: {}]
  %s12 = inlined_call_operand.vmem [shape: f32[1,128], index: 12, kind: input, shape index: {}]
  %s13 = inlined_call_operand.hbm [shape: f32[8,128], index: 13, kind: output, shape index: {}]
  %s14 = sld [smem:[#allocation0]]
  $region62: #{w2v_error_model_forward.1} parent=0
    _
  %s16 = ssub.s32 1, %s14
  %s17 = scalar_select 0, %s16, %s14
  $region1: #{w2v_error_model_forward.1} parent=0
    #allocation2 [shape = 'u8[4096]{0}', space=vmem, size = 0x1000, scoped, tag = 'output window, operand 0, single buffered']
    #allocation3 [shape = 's32[1]{0}', space=sflag, size = 0x4, scoped, tag = 'scoped memory for w2v_error_model_forward.1']
    %18 = vsyncpa [#allocation3], 0
    // Predicated region
    $region2: #{w2v_error_model_forward.1} parent=1 // pred_check
      _
    $region3: #{w2v_error_model_forward.1} parent=1 // pred_check_branch
      %20 = sbr.rel (0) target = $region5
    $region4: #{w2v_error_model_forward.1} parent=1 // pred_region
      _
    $region5: #{w2v_error_model_forward.1} parent=1 // pred_fallthru
      _
    // Predicated region
    $region6: #{w2v_error_model_forward.1} parent=1 // pred_check
      _
    $region7: #{w2v_error_model_forward.1} parent=1 // pred_check_branch
      %22 = sbr.rel (0) target = $region9
    $region8: #{w2v_error_model_forward.1} parent=1 // pred_region
      _
    $region9: #{w2v_error_model_forward.1} parent=1 // pred_fallthru
      _
    // Predicated region
    $region10: #{w2v_error_model_forward.1} parent=1 // pred_check
      _
    $region11: #{w2v_error_model_forward.1} parent=1 // pred_check_branch
      %24 = sbr.rel (0) target = $region13
    $region12: #{w2v_error_model_forward.1} parent=1 // pred_region
      _
    $region13: #{w2v_error_model_forward.1} parent=1 // pred_fallthru
      _
    // Predicated region
    $region14: #{w2v_error_model_forward.1} parent=1 // pred_check
      _
    $region15: #{w2v_error_model_forward.1} parent=1 // pred_check_branch
      %26 = sbr.rel (0) target = $region17
    $region16: #{w2v_error_model_forward.1} parent=1 // pred_region
      _
    $region17: #{w2v_error_model_forward.1} parent=1 // pred_fallthru
      _
    // Predicated region
    $region18: #{w2v_error_model_forward.1} parent=1 // pred_check
      _
    $region19: #{w2v_error_model_forward.1} parent=1 // pred_check_branch
      %28 = sbr.rel (0) target = $region21
    $region20: #{w2v_error_model_forward.1} parent=1 // pred_region
      _
    $region21: #{w2v_error_model_forward.1} parent=1 // pred_fallthru
      _
    // Predicated region
    $region22: #{w2v_error_model_forward.1} parent=1 // pred_check
      _
    $region23: #{w2v_error_model_forward.1} parent=1 // pred_check_branch
      %30 = sbr.rel (0) target = $region25
    $region24: #{w2v_error_model_forward.1} parent=1 // pred_region
      _
    $region25: #{w2v_error_model_forward.1} parent=1 // pred_fallthru
      _
    // Predicated region
    $region26: #{w2v_error_model_forward.1} parent=1 // pred_check
      _
    $region27: #{w2v_error_model_forward.1} parent=1 // pred_check_branch
      %32 = sbr.rel (0) target = $region29
    $region28: #{w2v_error_model_forward.1} parent=1 // pred_region
      _
    $region29: #{w2v_error_model_forward.1} parent=1 // pred_fallthru
      _
    // Predicated region
    $region30: #{w2v_error_model_forward.1} parent=1 // pred_check
      _
    $region31: #{w2v_error_model_forward.1} parent=1 // pred_check_branch
      %34 = sbr.rel (0) target = $region33
    $region32: #{w2v_error_model_forward.1} parent=1 // pred_region
      _
    $region33: #{w2v_error_model_forward.1} parent=1 // pred_fallthru
      _
    // Predicated region
    $region34: #{w2v_error_model_forward.1} parent=1 // pred_check
      _
    $region35: #{w2v_error_model_forward.1} parent=1 // pred_check_branch
      %36 = sbr.rel (0) target = $region37
    $region36: #{w2v_error_model_forward.1} parent=1 // pred_region
      _
    $region37: #{w2v_error_model_forward.1} parent=1 // pred_fallthru
      _
    // Predicated region
    $region38: #{w2v_error_model_forward.1} parent=1 // pred_check
      _
    $region39: #{w2v_error_model_forward.1} parent=1 // pred_check_branch
      %38 = sbr.rel (0) target = $region41
    $region40: #{w2v_error_model_forward.1} parent=1 // pred_region
      _
    $region41: #{w2v_error_model_forward.1} parent=1 // pred_fallthru
      _
    // Predicated region
    $region42: #{w2v_error_model_forward.1} parent=1 // pred_check
      _
    $region43: #{w2v_error_model_forward.1} parent=1 // pred_check_branch
      %40 = sbr.rel (0) target = $region45
    $region44: #{w2v_error_model_forward.1} parent=1 // pred_region
      _
    $region45: #{w2v_error_model_forward.1} parent=1 // pred_fallthru
      _
    // Predicated region
    $region46: #{w2v_error_model_forward.1} parent=1 // pred_check
      _
    $region47: #{w2v_error_model_forward.1} parent=1 // pred_check_branch
      %42 = sbr.rel (0) target = $region49
    $region48: #{w2v_error_model_forward.1} parent=1 // pred_region
      _
    $region49: #{w2v_error_model_forward.1} parent=1 // pred_fallthru
      _
    // Predicated region
    $region50: #{w2v_error_model_forward.1} parent=1 // pred_check
      _
    $region51: #{w2v_error_model_forward.1} parent=1 // pred_check_branch
      %44 = sbr.rel (0) target = $region53
    $region52: #{w2v_error_model_forward.1} parent=1 // pred_region
      _
    $region53: #{w2v_error_model_forward.1} parent=1 // pred_fallthru
      _
    %v45 = vld [vmem:[%s0] sm:$0xff]
    %v46 = vld [vmem:[%s0 + $0x8] sm:$0xff]
    %v47 = vld [vmem:[%s0 + $0x10] sm:$0xff]
    %v48 = vld [vmem:[%s0 + $0x18] sm:$0xff]
    %v49 = vld [vmem:[%s0 + $0x20] sm:$0xff]
    %v50 = vld [vmem:[%s0 + $0x28] sm:$0xff]
    %v51 = vld [vmem:[%s0 + $0x30] sm:$0xff]
    %v52 = vld [vmem:[%s0 + $0x38] sm:$0xff]
    %v53 = vld [vmem:[%s0 + $0x40] sm:$0xff]
    %v54 = vld [vmem:[%s0 + $0x48] sm:$0xff]
    %v55 = vld [vmem:[%s0 + $0x50] sm:$0xff]
    %v56 = vld [vmem:[%s0 + $0x58] sm:$0xff]
    %v57 = vld [vmem:[%s0 + $0x60] sm:$0xff]
    %v58 = vld [vmem:[%s0 + $0x68] sm:$0xff]
    %v59 = vld [vmem:[%s0 + $0x70] sm:$0xff]
    %v60 = vld [vmem:[%s0 + $0x78] sm:$0xff]
    %v61 = vlaneseq
    %v62 = vand.u32 %v61, 127
    %63 = vset.pattern.permute.xlu0 0
    %64 = vperm.xlu0 %63, %v45
    %v65 = vpop.permute.xlu0 %64
    %66 = vset.pattern.permute.xlu0 0
    %67 = vperm.xlu0 %66, %v46
    %v68 = vpop.permute.xlu0 %67
    %69 = vset.pattern.permute.xlu0 0
    %70 = vperm.xlu0 %69, %v47
    %v71 = vpop.permute.xlu0 %70
    %72 = vset.pattern.permute.xlu0 0
    %73 = vperm.xlu0 %72, %v48
    %v74 = vpop.permute.xlu0 %73
    %75 = vset.pattern.permute.xlu0 0
    %76 = vperm.xlu0 %75, %v49
    %v77 = vpop.permute.xlu0 %76
    %78 = vset.pattern.permute.xlu0 0
    %79 = vperm.xlu0 %78, %v50
    %v80 = vpop.permute.xlu0 %79
    %81 = vset.pattern.permute.xlu0 0
    %82 = vperm.xlu0 %81, %v51
    %v83 = vpop.permute.xlu0 %82
    %84 = vset.pattern.permute.xlu0 0
    %85 = vperm.xlu0 %84, %v52
    %v86 = vpop.permute.xlu0 %85
    %87 = vset.pattern.permute.xlu0 0
    %88 = vperm.xlu0 %87, %v53
    %v89 = vpop.permute.xlu0 %88
    %90 = vset.pattern.permute.xlu0 0
    %91 = vperm.xlu0 %90, %v54
    %v92 = vpop.permute.xlu0 %91
    %93 = vset.pattern.permute.xlu0 0
    %94 = vperm.xlu0 %93, %v55
    %v95 = vpop.permute.xlu0 %94
    %96 = vset.pattern.permute.xlu0 0
    %97 = vperm.xlu0 %96, %v56
    %v98 = vpop.permute.xlu0 %97
    %99 = vset.pattern.permute.xlu0 0
    %100 = vperm.xlu0 %99, %v57
    %v101 = vpop.permute.xlu0 %100
    %102 = vset.pattern.permute.xlu0 0
    %103 = vperm.xlu0 %102, %v58
    %v104 = vpop.permute.xlu0 %103
    %105 = vset.pattern.permute.xlu0 0
    %106 = vperm.xlu0 %105, %v59
    %v107 = vpop.permute.xlu0 %106
    %108 = vset.pattern.permute.xlu0 0
    %109 = vperm.xlu0 %108, %v60
    %v110 = vpop.permute.xlu0 %109
    %vm111 = vcmp.eq.s32.totalorder %v65, %v62
    %vm112 = vcmp.eq.s32.totalorder %v68, %v62
    %vm113 = vcmp.eq.s32.totalorder %v71, %v62
    %vm114 = vcmp.eq.s32.totalorder %v74, %v62
    %vm115 = vcmp.eq.s32.totalorder %v77, %v62
    %vm116 = vcmp.eq.s32.totalorder %v80, %v62
    %vm117 = vcmp.eq.s32.totalorder %v83, %v62
    %vm118 = vcmp.eq.s32.totalorder %v86, %v62
    %vm119 = vcmp.eq.s32.totalorder %v89, %v62
    %vm120 = vcmp.eq.s32.totalorder %v92, %v62
    %vm121 = vcmp.eq.s32.totalorder %v95, %v62
    %vm122 = vcmp.eq.s32.totalorder %v98, %v62
    %vm123 = vcmp.eq.s32.totalorder %v101, %v62
    %vm124 = vcmp.eq.s32.totalorder %v104, %v62
    %vm125 = vcmp.eq.s32.totalorder %v107, %v62
    %vm126 = vcmp.eq.s32.totalorder %v110, %v62
    %v127 = vsel %vm111, 1, 0
    %v128 = vsel %vm112, 1, 0
    %v129 = vsel %vm113, 1, 0
    %v130 = vsel %vm114, 1, 0
    %v131 = vsel %vm115, 1, 0
    %v132 = vsel %vm116, 1, 0
    %v133 = vsel %vm117, 1, 0
    %v134 = vsel %vm118, 1, 0
    %v135 = vsel %vm119, 1, 0
    %v136 = vsel %vm120, 1, 0
    %v137 = vsel %vm121, 1, 0
    %v138 = vsel %vm122, 1, 0
    %v139 = vsel %vm123, 1, 0
    %v140 = vsel %vm124, 1, 0
    %v141 = vsel %vm125, 1, 0
    %v142 = vsel %vm126, 1, 0
    %v143 = vcvt.s32.f32 %v127
    %v144 = vcvt.s32.f32 %v128
    %v145 = vcvt.s32.f32 %v129
    %v146 = vcvt.s32.f32 %v130
    %v147 = vcvt.s32.f32 %v131
    %v148 = vcvt.s32.f32 %v132
    %v149 = vcvt.s32.f32 %v133
    %v150 = vcvt.s32.f32 %v134
    %v151 = vcvt.s32.f32 %v135
    %v152 = vcvt.s32.f32 %v136
    %v153 = vcvt.s32.f32 %v137
    %v154 = vcvt.s32.f32 %v138
    %v155 = vcvt.s32.f32 %v139
    %v156 = vcvt.s32.f32 %v140
    %v157 = vcvt.s32.f32 %v141
    %v158 = vcvt.s32.f32 %v142
    %v159 = vld [vmem:[%s2] sm:$0xff]
    %v160 = vld [vmem:[%s2 + $0x8] sm:$0xff]
    %v161 = vld [vmem:[%s2 + $0x10] sm:$0xff]
    %v162 = vld [vmem:[%s2 + $0x18] sm:$0xff]
    %v163 = vld [vmem:[%s2 + $0x20] sm:$0xff]
    %v164 = vld [vmem:[%s2 + $0x28] sm:$0xff]
    %v165 = vld [vmem:[%s2 + $0x30] sm:$0xff]
    %v166 = vld [vmem:[%s2 + $0x38] sm:$0xff]
    %vm167 = vcmask 523264
    %v169 = vsel %vm167, %v143, 0
    %v172 = vsel %vm167, %v144, 0
    %v175 = vsel %vm167, %v145, 0
    %v178 = vsel %vm167, %v146, 0
    %v181 = vsel %vm167, %v147, 0
    %v184 = vsel %vm167, %v148, 0
    %v187 = vsel %vm167, %v149, 0
    %v190 = vsel %vm167, %v150, 0
    %v193 = vsel %vm167, %v151, 0
    %v196 = vsel %vm167, %v152, 0
    %v199 = vsel %vm167, %v153, 0
    %v202 = vsel %vm167, %v154, 0
    %v205 = vsel %vm167, %v155, 0
    %v208 = vsel %vm167, %v156, 0
    %v211 = vsel %vm167, %v157, 0
    %v214 = vsel %vm167, %v158, 0
    %216 = vmatprep.subr.mxu0 0.0
    %217 = vmatpush1.msra.mxu0 %v159
    %218 = vmatprep.subr.mxu0 0.0
    %219 = vmatpush1.msra.mxu0 %v160
    %220 = vmatprep.subr.mxu0 0.0
    %221 = vmatpush1.msra.mxu0 %v161
    %222 = vmatprep.subr.mxu0 0.0
    %223 = vmatpush1.msra.mxu0 %v162
    %224 = vmatprep.subr.mxu0 0.0
    %225 = vmatpush1.msra.mxu0 %v163
    %226 = vmatprep.subr.mxu0 0.0
    %227 = vmatpush1.msra.mxu0 %v164
    %228 = vmatprep.subr.mxu0 0.0
    %229 = vmatpush1.msra.mxu0 %v165
    %230 = vmatprep.subr.mxu0 0.0
    %231 = vmatpush1.msra.mxu0 %v166
    %232 = vmatprep.subr.mxu0 0.0
    %233 = vmatpush1.msra.mxu0 0.0
    %234 = vmatprep.subr.mxu0 0.0
    %235 = vmatpush1.msra.mxu0 0.0
    %236 = vmatprep.subr.mxu0 0.0
    %237 = vmatpush1.msra.mxu0 0.0
    %238 = vmatprep.subr.mxu0 0.0
    %239 = vmatpush1.msra.mxu0 0.0
    %240 = vmatprep.subr.mxu0 0.0
    %241 = vmatpush1.msra.mxu0 0.0
    %242 = vmatprep.subr.mxu0 0.0
    %243 = vmatpush1.msra.mxu0 0.0
    %244 = vmatprep.subr.mxu0 0.0
    %245 = vmatpush1.msra.mxu0 0.0
    %246 = vmatprep.subr.mxu0 0.0
    %247 = vmatpush1.msra.mxu0 0.0
    %248 = vmatprep.subr.mxu0 0.0
    %249 = vmatpush1.msra.mxu0 0.0
    %250 = vmatprep.subr.mxu0 0.0
    %251 = vmatpush1.msra.mxu0 0.0
    %252 = vmatprep.subr.mxu0 0.0
    %253 = vmatpush1.msra.mxu0 0.0
    %254 = vmatprep.subr.mxu0 0.0
    %255 = vmatpush1.msra.mxu0 0.0
    %256 = vmatprep.subr.mxu0 0.0
    %257 = vmatpush1.msra.mxu0 0.0
    %258 = vmatprep.subr.mxu0 0.0
    %259 = vmatpush1.msra.mxu0 0.0
    %260 = vmatprep.subr.mxu0 0.0
    %261 = vmatpush1.msra.mxu0 0.0
    %262 = vmatprep.subr.mxu0 0.0
    %263 = vmatpush1.msra.mxu0 0.0
    %264 = vmatprep.subr.mxu0 0.0
    %265 = vmatpush1.msra.mxu0 0.0
    %266 = vmatprep.subr.mxu0 0.0
    %267 = vmatpush1.msra.mxu0 0.0
    %268 = vmatprep.subr.mxu0 0.0
    %269 = vmatpush1.msra.mxu0 0.0
    %270 = vmatprep.subr.mxu0 0.0
    %271 = vmatpush1.msra.mxu0 0.0
    %272 = vmatprep.subr.mxu0 0.0
    %273 = vmatpush1.msra.mxu0 0.0
    %274 = vmatprep.subr.mxu0 0.0
    %275 = vmatpush1.msra.mxu0 0.0
    %276 = vmatprep.subr.mxu0 0.0
    %277 = vmatpush1.msra.mxu0 0.0
    %278 = vmatprep.subr.mxu0 0.0
    %279 = vmatpush1.msra.mxu0 0.0
    %280 = vmatprep.mubr.f32.mxu0 0.0
    %281 = vmatmul.mubr.f32.gmra.mrb[0].mxu0 %v169
    %v282 = vpop.f32.mrb[0].mxu0
    %v283 = vadd.f32 0.0, %v282
    %v284 = vpop.f32.mrb[0].mxu0
    %285 = vmatprep.mubr.f32.mxu0 0.0
    %286 = vmatmul.mubr.f32.gmra.mrb[0].mxu0 %v172
    %v287 = vpop.f32.mrb[0].mxu0
    %v288 = vadd.f32 0.0, %v287
    %v289 = vpop.f32.mrb[0].mxu0
    %290 = vmatprep.mubr.f32.mxu0 0.0
    %291 = vmatmul.mubr.f32.gmra.mrb[0].mxu0 %v175
    %v292 = vpop.f32.mrb[0].mxu0
    %v293 = vadd.f32 0.0, %v292
    %v294 = vpop.f32.mrb[0].mxu0
    %295 = vmatprep.mubr.f32.mxu0 0.0
    %296 = vmatmul.mubr.f32.gmra.mrb[0].mxu0 %v178
    %v297 = vpop.f32.mrb[0].mxu0
    %v298 = vadd.f32 0.0, %v297
    %v299 = vpop.f32.mrb[0].mxu0
    %300 = vmatprep.mubr.f32.mxu0 0.0
    %301 = vmatmul.mubr.f32.gmra.mrb[0].mxu0 %v181
    %v302 = vpop.f32.mrb[0].mxu0
    %v303 = vadd.f32 0.0, %v302
    %v304 = vpop.f32.mrb[0].mxu0
    %305 = vmatprep.mubr.f32.mxu0 0.0
    %306 = vmatmul.mubr.f32.gmra.mrb[0].mxu0 %v184
    %v307 = vpop.f32.mrb[0].mxu0
    %v308 = vadd.f32 0.0, %v307
    %v309 = vpop.f32.mrb[0].mxu0
    %310 = vmatprep.mubr.f32.mxu0 0.0
    %311 = vmatmul.mubr.f32.gmra.mrb[0].mxu0 %v187
    %v312 = vpop.f32.mrb[0].mxu0
    %v313 = vadd.f32 0.0, %v312
    %v314 = vpop.f32.mrb[0].mxu0
    %315 = vmatprep.mubr.f32.mxu0 0.0
    %316 = vmatmul.mubr.f32.gmra.mrb[0].mxu0 %v190
    %v317 = vpop.f32.mrb[0].mxu0
    %v318 = vadd.f32 0.0, %v317
    %v319 = vpop.f32.mrb[0].mxu0
    %320 = vmatprep.mubr.f32.mxu0 0.0
    %321 = vmatmul.mubr.f32.gmra.mrb[0].mxu0 %v193
    %v322 = vpop.f32.mrb[0].mxu0
    %v323 = vadd.f32 0.0, %v322
    %v324 = vpop.f32.mrb[0].mxu0
    %325 = vmatprep.mubr.f32.mxu0 0.0
    %326 = vmatmul.mubr.f32.gmra.mrb[0].mxu0 %v196
    %v327 = vpop.f32.mrb[0].mxu0
    %v328 = vadd.f32 0.0, %v327
    %v329 = vpop.f32.mrb[0].mxu0
    %330 = vmatprep.mubr.f32.mxu0 0.0
    %331 = vmatmul.mubr.f32.gmra.mrb[0].mxu0 %v199
    %v332 = vpop.f32.mrb[0].mxu0
    %v333 = vadd.f32 0.0, %v332
    %v334 = vpop.f32.mrb[0].mxu0
    %335 = vmatprep.mubr.f32.mxu0 0.0
    %336 = vmatmul.mubr.f32.gmra.mrb[0].mxu0 %v202
    %v337 = vpop.f32.mrb[0].mxu0
    %v338 = vadd.f32 0.0, %v337
    %v339 = vpop.f32.mrb[0].mxu0
    %340 = vmatprep.mubr.f32.mxu0 0.0
    %341 = vmatmul.mubr.f32.gmra.mrb[0].mxu0 %v205
    %v342 = vpop.f32.mrb[0].mxu0
    %v343 = vadd.f32 0.0, %v342
    %v344 = vpop.f32.mrb[0].mxu0
    %345 = vmatprep.mubr.f32.mxu0 0.0
    %346 = vmatmul.mubr.f32.gmra.mrb[0].mxu0 %v208
    %v347 = vpop.f32.mrb[0].mxu0
    %v348 = vadd.f32 0.0, %v347
    %v349 = vpop.f32.mrb[0].mxu0
    %350 = vmatprep.mubr.f32.mxu0 0.0
    %351 = vmatmul.mubr.f32.gmra.mrb[0].mxu0 %v211
    %v352 = vpop.f32.mrb[0].mxu0
    %v353 = vadd.f32 0.0, %v352
    %v354 = vpop.f32.mrb[0].mxu0
    %355 = vmatprep.mubr.f32.mxu0 0.0
    %356 = vmatmul.mubr.f32.gmra.mrb[0].mxu0 %v214
    %v357 = vpop.f32.mrb[0].mxu0
    %v358 = vadd.f32 0.0, %v357
    %v359 = vpop.f32.mrb[0].mxu0
    %360 = vdwg.mxu0
    %v361 = vld [vmem:[%s4] sm:$0xff]
    %v362 = vld [vmem:[%s4 + $0x8] sm:$0xff]
    %v363 = vld [vmem:[%s4 + $0x10] sm:$0xff]
    %v364 = vld [vmem:[%s4 + $0x18] sm:$0xff]
    %v365 = vld [vmem:[%s4 + $0x20] sm:$0xff]
    %v366 = vld [vmem:[%s4 + $0x28] sm:$0xff]
    %v367 = vld [vmem:[%s4 + $0x30] sm:$0xff]
    %v368 = vld [vmem:[%s4 + $0x38] sm:$0xff]
    %vm369 = vcmask 261120
    %v371 = vsel %vm369, %v283, 0
    %v374 = vsel %vm369, %v288, 0
    %v377 = vsel %vm369, %v293, 0
    %v380 = vsel %vm369, %v298, 0
    %v383 = vsel %vm369, %v303, 0
    %v386 = vsel %vm369, %v308, 0
    %v389 = vsel %vm369, %v313, 0
    %v392 = vsel %vm369, %v318, 0
    %394 = vmatprep.subr.mxu0 0.0
    %395 = vmatpush1.msra.mxu0 %v361
    %396 = vmatprep.subr.mxu0 0.0
    %397 = vmatpush1.msra.mxu0 %v362
    %398 = vmatprep.subr.mxu0 0.0
    %399 = vmatpush1.msra.mxu0 %v363
    %400 = vmatprep.subr.mxu0 0.0
    %401 = vmatpush1.msra.mxu0 %v364
    %402 = vmatprep.subr.mxu0 0.0
    %403 = vmatpush1.msra.mxu0 0.0
    %404 = vmatprep.subr.mxu0 0.0
    %405 = vmatpush1.msra.mxu0 0.0
    %406 = vmatprep.subr.mxu0 0.0
    %407 = vmatpush1.msra.mxu0 0.0
    %408 = vmatprep.subr.mxu0 0.0
    %409 = vmatpush1.msra.mxu0 0.0
    %410 = vmatprep.subr.mxu0 0.0
    %411 = vmatpush1.msra.mxu0 0.0
    %412 = vmatprep.subr.mxu0 0.0
    %413 = vmatpush1.msra.mxu0 0.0
    %414 = vmatprep.subr.mxu0 0.0
    %415 = vmatpush1.msra.mxu0 0.0
    %416 = vmatprep.subr.mxu0 0.0
    %417 = vmatpush1.msra.mxu0 0.0
    %418 = vmatprep.subr.mxu0 0.0
    %419 = vmatpush1.msra.mxu0 0.0
    %420 = vmatprep.subr.mxu0 0.0
    %421 = vmatpush1.msra.mxu0 0.0
    %422 = vmatprep.subr.mxu0 0.0
    %423 = vmatpush1.msra.mxu0 0.0
    %424 = vmatprep.subr.mxu0 0.0
    %425 = vmatpush1.msra.mxu0 0.0
    %426 = vmatprep.subr.mxu0 0.0
    %427 = vmatpush1.msra.mxu0 0.0
    %428 = vmatprep.subr.mxu0 0.0
    %429 = vmatpush1.msra.mxu0 0.0
    %430 = vmatprep.subr.mxu0 0.0
    %431 = vmatpush1.msra.mxu0 0.0
    %432 = vmatprep.subr.mxu0 0.0
    %433 = vmatpush1.msra.mxu0 0.0
    %434 = vmatprep.subr.mxu0 0.0
    %435 = vmatpush1.msra.mxu0 0.0
    %436 = vmatprep.subr.mxu0 0.0
    %437 = vmatpush1.msra.mxu0 0.0
    %438 = vmatprep.subr.mxu0 0.0
    %439 = vmatpush1.msra.mxu0 0.0
    %440 = vmatprep.subr.mxu0 0.0
    %441 = vmatpush1.msra.mxu0 0.0
    %442 = vmatprep.subr.mxu0 0.0
    %443 = vmatpush1.msra.mxu0 0.0
    %444 = vmatprep.subr.mxu0 0.0
    %445 = vmatpush1.msra.mxu0 0.0
    %446 = vmatprep.subr.mxu0 0.0
    %447 = vmatpush1.msra.mxu0 0.0
    %448 = vmatprep.subr.mxu0 0.0
    %449 = vmatpush1.msra.mxu0 0.0
    %450 = vmatprep.subr.mxu0 0.0
    %451 = vmatpush1.msra.mxu0 0.0
    %452 = vmatprep.subr.mxu0 0.0
    %453 = vmatpush1.msra.mxu0 0.0
    %454 = vmatprep.subr.mxu0 0.0
    %455 = vmatpush1.msra.mxu0 0.0
    %456 = vmatprep.subr.mxu0 0.0
    %457 = vmatpush1.msra.mxu0 0.0
    %458 = vmatprep.mubr.f32.mxu0 0.0
    %459 = vmatmul.mubr.f32.gmra.mrb[0].mxu0 %v371
    %v460 = vpop.f32.mrb[0].mxu0
    %v461 = vadd.f32 0.0, %v460
    %v462 = vpop.f32.mrb[0].mxu0
    %463 = vmatprep.mubr.f32.mxu0 0.0
    %464 = vmatmul.mubr.f32.gmra.mrb[0].mxu0 %v374
    %v465 = vpop.f32.mrb[0].mxu0
    %v466 = vadd.f32 0.0, %v465
    %v467 = vpop.f32.mrb[0].mxu0
    %468 = vmatprep.mubr.f32.mxu0 0.0
    %469 = vmatmul.mubr.f32.gmra.mrb[0].mxu0 %v377
    %v470 = vpop.f32.mrb[0].mxu0
    %v471 = vadd.f32 0.0, %v470
    %v472 = vpop.f32.mrb[0].mxu0
    %473 = vmatprep.mubr.f32.mxu0 0.0
    %474 = vmatmul.mubr.f32.gmra.mrb[0].mxu0 %v380
    %v475 = vpop.f32.mrb[0].mxu0
    %v476 = vadd.f32 0.0, %v475
    %v477 = vpop.f32.mrb[0].mxu0
    %478 = vmatprep.mubr.f32.mxu0 0.0
    %479 = vmatmul.mubr.f32.gmra.mrb[0].mxu0 %v383
    %v480 = vpop.f32.mrb[0].mxu0
    %v481 = vadd.f32 0.0, %v480
    %v482 = vpop.f32.mrb[0].mxu0
    %483 = vmatprep.mubr.f32.mxu0 0.0
    %484 = vmatmul.mubr.f32.gmra.mrb[0].mxu0 %v386
    %v485 = vpop.f32.mrb[0].mxu0
    %v486 = vadd.f32 0.0, %v485
    %v487 = vpop.f32.mrb[0].mxu0
    %488 = vmatprep.mubr.f32.mxu0 0.0
    %489 = vmatmul.mubr.f32.gmra.mrb[0].mxu0 %v389
    %v490 = vpop.f32.mrb[0].mxu0
    %v491 = vadd.f32 0.0, %v490
    %v492 = vpop.f32.mrb[0].mxu0
    %493 = vmatprep.mubr.f32.mxu0 0.0
    %494 = vmatmul.mubr.f32.gmra.mrb[0].mxu0 %v392
    %v495 = vpop.f32.mrb[0].mxu0
    %v496 = vadd.f32 0.0, %v495
    %v497 = vpop.f32.mrb[0].mxu0
    %498 = vdwg.mxu0
    %v500 = vsel %vm369, %v323, 0
    %v503 = vsel %vm369, %v328, 0
    %v506 = vsel %vm369, %v333, 0
    %v509 = vsel %vm369, %v338, 0
    %v512 = vsel %vm369, %v343, 0
    %v515 = vsel %vm369, %v348, 0
    %v518 = vsel %vm369, %v353, 0
    %v521 = vsel %vm369, %v358, 0
    %523 = vmatprep.subr.mxu0 0.0
    %524 = vmatpush1.msra.mxu0 %v365
    %525 = vmatprep.subr.mxu0 0.0
    %526 = vmatpush1.msra.mxu0 %v366
    %527 = vmatprep.subr.mxu0 0.0
    %528 = vmatpush1.msra.mxu0 %v367
    %529 = vmatprep.subr.mxu0 0.0
    %530 = vmatpush1.msra.mxu0 %v368
    %531 = vmatprep.subr.mxu0 0.0
    %532 = vmatpush1.msra.mxu0 0.0
    %533 = vmatprep.subr.mxu0 0.0
    %534 = vmatpush1.msra.mxu0 0.0
    %535 = vmatprep.subr.mxu0 0.0
    %536 = vmatpush1.msra.mxu0 0.0
    %537 = vmatprep.subr.mxu0 0.0
    %538 = vmatpush1.msra.mxu0 0.0
    %539 = vmatprep.subr.mxu0 0.0
    %540 = vmatpush1.msra.mxu0 0.0
    %541 = vmatprep.subr.mxu0 0.0
    %542 = vmatpush1.msra.mxu0 0.0
    %543 = vmatprep.subr.mxu0 0.0
    %544 = vmatpush1.msra.mxu0 0.0
    %545 = vmatprep.subr.mxu0 0.0
    %546 = vmatpush1.msra.mxu0 0.0
    %547 = vmatprep.subr.mxu0 0.0
    %548 = vmatpush1.msra.mxu0 0.0
    %549 = vmatprep.subr.mxu0 0.0
    %550 = vmatpush1.msra.mxu0 0.0
    %551 = vmatprep.subr.mxu0 0.0
    %552 = vmatpush1.msra.mxu0 0.0
    %553 = vmatprep.subr.mxu0 0.0
    %554 = vmatpush1.msra.mxu0 0.0
    %555 = vmatprep.subr.mxu0 0.0
    %556 = vmatpush1.msra.mxu0 0.0
    %557 = vmatprep.subr.mxu0 0.0
    %558 = vmatpush1.msra.mxu0 0.0
    %559 = vmatprep.subr.mxu0 0.0
    %560 = vmatpush1.msra.mxu0 0.0
    %561 = vmatprep.subr.mxu0 0.0
    %562 = vmatpush1.msra.mxu0 0.0
    %563 = vmatprep.subr.mxu0 0.0
    %564 = vmatpush1.msra.mxu0 0.0
    %565 = vmatprep.subr.mxu0 0.0
    %566 = vmatpush1.msra.mxu0 0.0
    %567 = vmatprep.subr.mxu0 0.0
    %568 = vmatpush1.msra.mxu0 0.0
    %569 = vmatprep.subr.mxu0 0.0
    %570 = vmatpush1.msra.mxu0 0.0
    %571 = vmatprep.subr.mxu0 0.0
    %572 = vmatpush1.msra.mxu0 0.0
    %573 = vmatprep.subr.mxu0 0.0
    %574 = vmatpush1.msra.mxu0 0.0
    %575 = vmatprep.subr.mxu0 0.0
    %576 = vmatpush1.msra.mxu0 0.0
    %577 = vmatprep.subr.mxu0 0.0
    %578 = vmatpush1.msra.mxu0 0.0
    %579 = vmatprep.subr.mxu0 0.0
    %580 = vmatpush1.msra.mxu0 0.0
    %581 = vmatprep.subr.mxu0 0.0
    %582 = vmatpush1.msra.mxu0 0.0
    %583 = vmatprep.subr.mxu0 0.0
    %584 = vmatpush1.msra.mxu0 0.0
    %585 = vmatprep.subr.mxu0 0.0
    %586 = vmatpush1.msra.mxu0 0.0
    %587 = vmatprep.mubr.f32.mxu0 0.0
    %588 = vmatmul.mubr.f32.gmra.mrb[0].mxu0 %v500
    %v589 = vpop.f32.mrb[0].mxu0
    %v590 = vadd.f32 0.0, %v589
    %v591 = vpop.f32.mrb[0].mxu0
    %592 = vmatprep.mubr.f32.mxu0 0.0
    %593 = vmatmul.mubr.f32.gmra.mrb[0].mxu0 %v503
    %v594 = vpop.f32.mrb[0].mxu0
    %v595 = vadd.f32 0.0, %v594
    %v596 = vpop.f32.mrb[0].mxu0
    %597 = vmatprep.mubr.f32.mxu0 0.0
    %598 = vmatmul.mubr.f32.gmra.mrb[0].mxu0 %v506
    %v599 = vpop.f32.mrb[0].mxu0
    %v600 = vadd.f32 0.0, %v599
    %v601 = vpop.f32.mrb[0].mxu0
    %602 = vmatprep.mubr.f32.mxu0 0.0
    %603 = vmatmul.mubr.f32.gmra.mrb[0].mxu0 %v509
    %v604 = vpop.f32.mrb[0].mxu0
    %v605 = vadd.f32 0.0, %v604
    %v606 = vpop.f32.mrb[0].mxu0
    %607 = vmatprep.mubr.f32.mxu0 0.0
    %608 = vmatmul.mubr.f32.gmra.mrb[0].mxu0 %v512
    %v609 = vpop.f32.mrb[0].mxu0
    %v610 = vadd.f32 0.0, %v609
    %v611 = vpop.f32.mrb[0].mxu0
    %612 = vmatprep.mubr.f32.mxu0 0.0
    %613 = vmatmul.mubr.f32.gmra.mrb[0].mxu0 %v515
    %v614 = vpop.f32.mrb[0].mxu0
    %v615 = vadd.f32 0.0, %v614
    %v616 = vpop.f32.mrb[0].mxu0
    %617 = vmatprep.mubr.f32.mxu0 0.0
    %618 = vmatmul.mubr.f32.gmra.mrb[0].mxu0 %v518
    %v619 = vpop.f32.mrb[0].mxu0
    %v620 = vadd.f32 0.0, %v619
    %v621 = vpop.f32.mrb[0].mxu0
    %622 = vmatprep.mubr.f32.mxu0 0.0
    %623 = vmatmul.mubr.f32.gmra.mrb[0].mxu0 %v521
    %v624 = vpop.f32.mrb[0].mxu0
    %v625 = vadd.f32 0.0, %v624
    %v626 = vpop.f32.mrb[0].mxu0
    %627 = vdwg.mxu0
    %v628 = vld [vmem:[%s5] sm:$0xff]
    %v629 = vld [vmem:[%s5 + $0x8] sm:$0xff]
    %v630 = vld [vmem:[%s5 + $0x10] sm:$0xff]
    %v631 = vld [vmem:[%s5 + $0x18] sm:$0xff]
    %v632 = vld [vmem:[%s5 + $0x20] sm:$0xff]
    %v633 = vld [vmem:[%s5 + $0x28] sm:$0xff]
    %v634 = vld [vmem:[%s5 + $0x30] sm:$0xff]
    %v635 = vld [vmem:[%s5 + $0x38] sm:$0xff]
    %v636 = vld [vmem:[%s6] sm:$0x1]
    %v637 = vld [vmem:[%s6 + $0x1] sm:$0x1]
    %v639 = vsel %vm369, 0.0, 0
    %641 = vmatprep.subr.mxu0 0.0
    %642 = vmatpush1.msra.mxu0 %v628
    %643 = vmatprep.subr.mxu0 0.0
    %644 = vmatpush1.msra.mxu0 %v629
    %645 = vmatprep.subr.mxu0 0.0
    %646 = vmatpush1.msra.mxu0 %v630
    %647 = vmatprep.subr.mxu0 0.0
    %648 = vmatpush1.msra.mxu0 %v631
    %649 = vmatprep.subr.mxu0 0.0
    %650 = vmatpush1.msra.mxu0 0.0
    %651 = vmatprep.subr.mxu0 0.0
    %652 = vmatpush1.msra.mxu0 0.0
    %653 = vmatprep.subr.mxu0 0.0
    %654 = vmatpush1.msra.mxu0 0.0
    %655 = vmatprep.subr.mxu0 0.0
    %656 = vmatpush1.msra.mxu0 0.0
    %657 = vmatprep.subr.mxu0 0.0
    %658 = vmatpush1.msra.mxu0 0.0
    %659 = vmatprep.subr.mxu0 0.0
    %660 = vmatpush1.msra.mxu0 0.0
    %661 = vmatprep.subr.mxu0 0.0
    %662 = vmatpush1.msra.mxu0 0.0
    %663 = vmatprep.subr.mxu0 0.0
    %664 = vmatpush1.msra.mxu0 0.0
    %665 = vmatprep.subr.mxu0 0.0
    %666 = vmatpush1.msra.mxu0 0.0
    %667 = vmatprep.subr.mxu0 0.0
    %668 = vmatpush1.msra.mxu0 0.0
    %669 = vmatprep.subr.mxu0 0.0
    %670 = vmatpush1.msra.mxu0 0.0
    %671 = vmatprep.subr.mxu0 0.0
    %672 = vmatpush1.msra.mxu0 0.0
    %673 = vmatprep.subr.mxu0 0.0
    %674 = vmatpush1.msra.mxu0 0.0
    %675 = vmatprep.subr.mxu0 0.0
    %676 = vmatpush1.msra.mxu0 0.0
    %677 = vmatprep.subr.mxu0 0.0
    %678 = vmatpush1.msra.mxu0 0.0
    %679 = vmatprep.subr.mxu0 0.0
    %680 = vmatpush1.msra.mxu0 0.0
    %681 = vmatprep.subr.mxu0 0.0
    %682 = vmatpush1.msra.mxu0 0.0
    %683 = vmatprep.subr.mxu0 0.0
    %684 = vmatpush1.msra.mxu0 0.0
    %685 = vmatprep.subr.mxu0 0.0
    %686 = vmatpush1.msra.mxu0 0.0
    %687 = vmatprep.subr.mxu0 0.0
    %688 = vmatpush1.msra.mxu0 0.0
    %689 = vmatprep.subr.mxu0 0.0
    %690 = vmatpush1.msra.mxu0 0.0
    %691 = vmatprep.subr.mxu0 0.0
    %692 = vmatpush1.msra.mxu0 0.0
    %693 = vmatprep.subr.mxu0 0.0
    %694 = vmatpush1.msra.mxu0 0.0
    %695 = vmatprep.subr.mxu0 0.0
    %696 = vmatpush1.msra.mxu0 0.0
    %697 = vmatprep.subr.mxu0 0.0
    %698 = vmatpush1.msra.mxu0 0.0
    %699 = vmatprep.subr.mxu0 0.0
    %700 = vmatpush1.msra.mxu0 0.0
    %701 = vmatprep.subr.mxu0 0.0
    %702 = vmatpush1.msra.mxu0 0.0
    %703 = vmatprep.subr.mxu0 0.0
    %704 = vmatpush1.msra.mxu0 0.0
    %705 = vmatprep.mubr.f32.mxu0 0.0
    %706 = vmatmul.mubr.f32.gmra.mrb[0].mxu0 %v639
    %v707 = vpop.f32.mrb[0].mxu0
    %v708 = vadd.f32 0.0, %v707
    %v709 = vpop.f32.mrb[0].mxu0
    %710 = vdwg.mxu0
    %711 = vmatprep.subr.mxu0 0.0
    %712 = vmatpush1.msra.mxu0 %v632
    %713 = vmatprep.subr.mxu0 0.0
    %714 = vmatpush1.msra.mxu0 %v633
    %715 = vmatprep.subr.mxu0 0.0
    %716 = vmatpush1.msra.mxu0 %v634
    %717 = vmatprep.subr.mxu0 0.0
    %718 = vmatpush1.msra.mxu0 %v635
    %719 = vmatprep.subr.mxu0 0.0
    %720 = vmatpush1.msra.mxu0 0.0
    %721 = vmatprep.subr.mxu0 0.0
    %722 = vmatpush1.msra.mxu0 0.0
    %723 = vmatprep.subr.mxu0 0.0
    %724 = vmatpush1.msra.mxu0 0.0
    %725 = vmatprep.subr.mxu0 0.0
    %726 = vmatpush1.msra.mxu0 0.0
    %727 = vmatprep.subr.mxu0 0.0
    %728 = vmatpush1.msra.mxu0 0.0
    %729 = vmatprep.subr.mxu0 0.0
    %730 = vmatpush1.msra.mxu0 0.0
    %731 = vmatprep.subr.mxu0 0.0
    %732 = vmatpush1.msra.mxu0 0.0
    %733 = vmatprep.subr.mxu0 0.0
    %734 = vmatpush1.msra.mxu0 0.0
    %735 = vmatprep.subr.mxu0 0.0
    %736 = vmatpush1.msra.mxu0 0.0
    %737 = vmatprep.subr.mxu0 0.0
    %738 = vmatpush1.msra.mxu0 0.0
    %739 = vmatprep.subr.mxu0 0.0
    %740 = vmatpush1.msra.mxu0 0.0
    %741 = vmatprep.subr.mxu0 0.0
    %742 = vmatpush1.msra.mxu0 0.0
    %743 = vmatprep.subr.mxu0 0.0
    %744 = vmatpush1.msra.mxu0 0.0
    %745 = vmatprep.subr.mxu0 0.0
    %746 = vmatpush1.msra.mxu0 0.0
    %747 = vmatprep.subr.mxu0 0.0
    %748 = vmatpush1.msra.mxu0 0.0
    %749 = vmatprep.subr.mxu0 0.0
    %750 = vmatpush1.msra.mxu0 0.0
    %751 = vmatprep.subr.mxu0 0.0
    %752 = vmatpush1.msra.mxu0 0.0
    %753 = vmatprep.subr.mxu0 0.0
    %754 = vmatpush1.msra.mxu0 0.0
    %755 = vmatprep.subr.mxu0 0.0
    %756 = vmatpush1.msra.mxu0 0.0
    %757 = vmatprep.subr.mxu0 0.0
    %758 = vmatpush1.msra.mxu0 0.0
    %759 = vmatprep.subr.mxu0 0.0
    %760 = vmatpush1.msra.mxu0 0.0
    %761 = vmatprep.subr.mxu0 0.0
    %762 = vmatpush1.msra.mxu0 0.0
    %763 = vmatprep.subr.mxu0 0.0
    %764 = vmatpush1.msra.mxu0 0.0
    %765 = vmatprep.subr.mxu0 0.0
    %766 = vmatpush1.msra.mxu0 0.0
    %767 = vmatprep.subr.mxu0 0.0
    %768 = vmatpush1.msra.mxu0 0.0
    %769 = vmatprep.subr.mxu0 0.0
    %770 = vmatpush1.msra.mxu0 0.0
    %771 = vmatprep.subr.mxu0 0.0
    %772 = vmatpush1.msra.mxu0 0.0
    %773 = vmatprep.subr.mxu0 0.0
    %774 = vmatpush1.msra.mxu0 0.0
    %775 = vmatprep.mubr.f32.mxu0 0.0
    %776 = vmatmul.mubr.f32.gmra.mrb[0].mxu0 %v639
    %v777 = vpop.f32.mrb[0].mxu0
    %v778 = vadd.f32 0.0, %v777
    %v779 = vpop.f32.mrb[0].mxu0
    %780 = vdwg.mxu0
    %v781 = vadd.f32 %v461, %v708
    %v782 = vadd.f32 %v590, %v778
    %v785 = vlaneseq
    %v786 = vshrl.u32 %v785, 7
    %v787 = vsub.s32 0, %v786
    %v788 = vrot.slane %v636, %v787
    %v789 = vlaneseq
    %v790 = vshrl.u32 %v789, 7
    %v791 = vsub.s32 0, %v790
    %v792 = vrot.slane %v637, %v791
    %v795 = vadd.f32 %v781, %v788
    %v796 = vadd.f32 %v782, %v792
    %v797 = vxor.u32 %v795, 2147483648
    %v798 = vxor.u32 %v796, 2147483648
    %v799 = vmul.f32 %v797, 1.442695
    %v800 = vpow.pop %v799
    %v801 = vmul.f32 %v798, 1.442695
    %v802 = vpow.pop %v801
    %v803 = vadd.f32 %v800, 1.0
    %v804 = vadd.f32 %v802, 1.0
    %v805 = vrcp.pop %v803
    %v806 = vmul.f32 1.0, %v805
    %v807 = vrcp.pop %v804
    %v808 = vmul.f32 1.0, %v807
    %v809 = vtanh.pop %v795
    %v810 = vtanh.pop %v796
    %v811 = vmul.f32 %v806, 0.0
    %v812 = vmul.f32 %v808, 0.0
    %815 = vrot.lane.b32.xlu0 %v809, 64
    %v816 = vpop.permute.xlu0 %815
    %817 = vrot.lane.b32.xlu0 %v810, 64
    %v818 = vpop.permute.xlu0 %817
    %v821 = vmul.f32 %v806, %v816
    %v822 = vmul.f32 %v808, %v818
    %825 = vrot.lane.b32.xlu0 %v821, 32
    %v826 = vpop.permute.xlu0 %825
    %827 = vrot.lane.b32.xlu0 %v822, 32
    %v828 = vpop.permute.xlu0 %827
    %v831 = vadd.f32 %v811, %v826
    %v832 = vadd.f32 %v812, %v828
    %v833 = vtanh.pop %v831
    %v834 = vtanh.pop %v832
    %837 = vrot.lane.b32.xlu0 %v833, 64
    %v838 = vpop.permute.xlu0 %837
    %839 = vrot.lane.b32.xlu0 %v834, 64
    %v840 = vpop.permute.xlu0 %839
    %v843 = vmul.f32 %v806, %v838
    %v844 = vmul.f32 %v808, %v840
    %846 = vrot.lane.b32.xlu0 %v843, 32
    %v847 = vpop.permute.xlu0 %846
    %v848 = vsel %vm369, %v847, 0
    %850 = vmatprep.subr.mxu0 0.0
    %851 = vmatpush1.msra.mxu0 %v628
    %852 = vmatprep.subr.mxu0 0.0
    %853 = vmatpush1.msra.mxu0 %v629
    %854 = vmatprep.subr.mxu0 0.0
    %855 = vmatpush1.msra.mxu0 %v630
    %856 = vmatprep.subr.mxu0 0.0
    %857 = vmatpush1.msra.mxu0 %v631
    %858 = vmatprep.subr.mxu0 0.0
    %859 = vmatpush1.msra.mxu0 0.0
    %860 = vmatprep.subr.mxu0 0.0
    %861 = vmatpush1.msra.mxu0 0.0
    %862 = vmatprep.subr.mxu0 0.0
    %863 = vmatpush1.msra.mxu0 0.0
    %864 = vmatprep.subr.mxu0 0.0
    %865 = vmatpush1.msra.mxu0 0.0
    %866 = vmatprep.subr.mxu0 0.0
    %867 = vmatpush1.msra.mxu0 0.0
    %868 = vmatprep.subr.mxu0 0.0
    %869 = vmatpush1.msra.mxu0 0.0
    %870 = vmatprep.subr.mxu0 0.0
    %871 = vmatpush1.msra.mxu0 0.0
    %872 = vmatprep.subr.mxu0 0.0
    %873 = vmatpush1.msra.mxu0 0.0
    %874 = vmatprep.subr.mxu0 0.0
    %875 = vmatpush1.msra.mxu0 0.0
    %876 = vmatprep.subr.mxu0 0.0
    %877 = vmatpush1.msra.mxu0 0.0
    %878 = vmatprep.subr.mxu0 0.0
    %879 = vmatpush1.msra.mxu0 0.0
    %880 = vmatprep.subr.mxu0 0.0
    %881 = vmatpush1.msra.mxu0 0.0
    %882 = vmatprep.subr.mxu0 0.0
    %883 = vmatpush1.msra.mxu0 0.0
    %884 = vmatprep.subr.mxu0 0.0
    %885 = vmatpush1.msra.mxu0 0.0
    %886 = vmatprep.subr.mxu0 0.0
    %887 = vmatpush1.msra.mxu0 0.0
    %888 = vmatprep.subr.mxu0 0.0
    %889 = vmatpush1.msra.mxu0 0.0
    %890 = vmatprep.subr.mxu0 0.0
    %891 = vmatpush1.msra.mxu0 0.0
    %892 = vmatprep.subr.mxu0 0.0
    %893 = vmatpush1.msra.mxu0 0.0
    %894 = vmatprep.subr.mxu0 0.0
    %895 = vmatpush1.msra.mxu0 0.0
    %896 = vmatprep.subr.mxu0 0.0
    %897 = vmatpush1.msra.mxu0 0.0
    %898 = vmatprep.subr.mxu0 0.0
    %899 = vmatpush1.msra.mxu0 0.0
    %900 = vmatprep.subr.mxu0 0.0
    %901 = vmatpush1.msra.mxu0 0.0
    %902 = vmatprep.subr.mxu0 0.0
    %903 = vmatpush1.msra.mxu0 0.0
    %904 = vmatprep.subr.mxu0 0.0
    %905 = vmatpush1.msra.mxu0 0.0
    %906 = vmatprep.subr.mxu0 0.0
    %907 = vmatpush1.msra.mxu0 0.0
    %908 = vmatprep.subr.mxu0 0.0
    %909 = vmatpush1.msra.mxu0 0.0
    %910 = vmatprep.subr.mxu0 0.0
    %911 = vmatpush1.msra.mxu0 0.0
    %912 = vmatprep.subr.mxu0 0.0
    %913 = vmatpush1.msra.mxu0 0.0
    %914 = vmatprep.mubr.f32.mxu0 0.0
    %915 = vmatmul.mubr.f32.gmra.mrb[0].mxu0 %v848
    %v916 = vpop.f32.mrb[0].mxu0
    %v917 = vadd.f32 0.0, %v916
    %v918 = vpop.f32.mrb[0].mxu0
    %919 = vdwg.mxu0
    %921 = vrot.lane.b32.xlu0 %v844, 32
    %v922 = vpop.permute.xlu0 %921
    %v923 = vsel %vm369, %v922, 0
    %925 = vmatprep.subr.mxu0 0.0
    %926 = vmatpush1.msra.mxu0 %v632
    %927 = vmatprep.subr.mxu0 0.0
    %928 = vmatpush1.msra.mxu0 %v633
    %929 = vmatprep.subr.mxu0 0.0
    %930 = vmatpush1.msra.mxu0 %v634
    %931 = vmatprep.subr.mxu0 0.0
    %932 = vmatpush1.msra.mxu0 %v635
    %933 = vmatprep.subr.mxu0 0.0
    %934 = vmatpush1.msra.mxu0 0.0
    %935 = vmatprep.subr.mxu0 0.0
    %936 = vmatpush1.msra.mxu0 0.0
    %937 = vmatprep.subr.mxu0 0.0
    %938 = vmatpush1.msra.mxu0 0.0
    %939 = vmatprep.subr.mxu0 0.0
    %940 = vmatpush1.msra.mxu0 0.0
    %941 = vmatprep.subr.mxu0 0.0
    %942 = vmatpush1.msra.mxu0 0.0
    %943 = vmatprep.subr.mxu0 0.0
    %944 = vmatpush1.msra.mxu0 0.0
    %945 = vmatprep.subr.mxu0 0.0
    %946 = vmatpush1.msra.mxu0 0.0
    %947 = vmatprep.subr.mxu0 0.0
    %948 = vmatpush1.msra.mxu0 0.0
    %949 = vmatprep.subr.mxu0 0.0
    %950 = vmatpush1.msra.mxu0 0.0
    %951 = vmatprep.subr.mxu0 0.0
    %952 = vmatpush1.msra.mxu0 0.0
    %953 = vmatprep.subr.mxu0 0.0
    %954 = vmatpush1.msra.mxu0 0.0
    %955 = vmatprep.subr.mxu0 0.0
    %956 = vmatpush1.msra.mxu0 0.0
    %957 = vmatprep.subr.mxu0 0.0
    %958 = vmatpush1.msra.mxu0 0.0
    %959 = vmatprep.subr.mxu0 0.0
    %960 = vmatpush1.msra.mxu0 0.0
    %961 = vmatprep.subr.mxu0 0.0
    %962 = vmatpush1.msra.mxu0 0.0
    %963 = vmatprep.subr.mxu0 0.0
    %964 = vmatpush1.msra.mxu0 0.0
    %965 = vmatprep.subr.mxu0 0.0
    %966 = vmatpush1.msra.mxu0 0.0
    %967 = vmatprep.subr.mxu0 0.0
    %968 = vmatpush1.msra.mxu0 0.0
    %969 = vmatprep.subr.mxu0 0.0
    %970 = vmatpush1.msra.mxu0 0.0
    %971 = vmatprep.subr.mxu0 0.0
    %972 = vmatpush1.msra.mxu0 0.0
    %973 = vmatprep.subr.mxu0 0.0
    %974 = vmatpush1.msra.mxu0 0.0
    %975 = vmatprep.subr.mxu0 0.0
    %976 = vmatpush1.msra.mxu0 0.0
    %977 = vmatprep.subr.mxu0 0.0
    %978 = vmatpush1.msra.mxu0 0.0
    %979 = vmatprep.subr.mxu0 0.0
    %980 = vmatpush1.msra.mxu0 0.0
    %981 = vmatprep.subr.mxu0 0.0
    %982 = vmatpush1.msra.mxu0 0.0
    %983 = vmatprep.subr.mxu0 0.0
    %984 = vmatpush1.msra.mxu0 0.0
    %985 = vmatprep.subr.mxu0 0.0
    %986 = vmatpush1.msra.mxu0 0.0
    %987 = vmatprep.subr.mxu0 0.0
    %988 = vmatpush1.msra.mxu0 0.0
    %989 = vmatprep.mubr.f32.mxu0 0.0
    %990 = vmatmul.mubr.f32.gmra.mrb[0].mxu0 %v923
    %v991 = vpop.f32.mrb[0].mxu0
    %v992 = vadd.f32 0.0, %v991
    %v993 = vpop.f32.mrb[0].mxu0
    %994 = vdwg.mxu0
    %v995 = vadd.f32 %v466, %v917
    %v996 = vadd.f32 %v595, %v992
    %v997 = vadd.f32 %v995, %v788
    %v998 = vadd.f32 %v996, %v792
    %v999 = vxor.u32 %v997, 2147483648
    %v1000 = vxor.u32 %v998, 2147483648
    %v1001 = vmul.f32 %v999, 1.442695
    %v1002 = vpow.pop %v1001
    %v1003 = vmul.f32 %v1000, 1.442695
    %v1004 = vpow.pop %v1003
    %v1005 = vadd.f32 %v1002, 1.0
    %v1006 = vadd.f32 %v1004, 1.0
    %v1007 = vrcp.pop %v1005
    %v1008 = vmul.f32 1.0, %v1007
    %v1009 = vrcp.pop %v1006
    %v1010 = vmul.f32 1.0, %v1009
    %v1011 = vtanh.pop %v997
    %v1012 = vtanh.pop %v998
    %v1013 = vmul.f32 %v1008, %v831
    %v1014 = vmul.f32 %v1010, %v832
    %1017 = vrot.lane.b32.xlu0 %v1011, 64
    %v1018 = vpop.permute.xlu0 %1017
    %1019 = vrot.lane.b32.xlu0 %v1012, 64
    %v1020 = vpop.permute.xlu0 %1019
    %v1023 = vmul.f32 %v1008, %v1018
    %v1024 = vmul.f32 %v1010, %v1020
    %1027 = vrot.lane.b32.xlu0 %v1023, 32
    %v1028 = vpop.permute.xlu0 %1027
    %1029 = vrot.lane.b32.xlu0 %v1024, 32
    %v1030 = vpop.permute.xlu0 %1029
    %v1033 = vadd.f32 %v1013, %v1028
    %v1034 = vadd.f32 %v1014, %v1030
    %v1035 = vtanh.pop %v1033
    %v1036 = vtanh.pop %v1034
    %1039 = vrot.lane.b32.xlu0 %v1035, 64
    %v1040 = vpop.permute.xlu0 %1039
    %1041 = vrot.lane.b32.xlu0 %v1036, 64
    %v1042 = vpop.permute.xlu0 %1041
    %v1045 = vmul.f32 %v1008, %v1040
    %v1046 = vmul.f32 %v1010, %v1042
    %1048 = vrot.lane.b32.xlu0 %v1045, 32
    %v1049 = vpop.permute.xlu0 %1048
    %v1050 = vsel %vm369, %v1049, 0
    %1052 = vmatprep.subr.mxu0 0.0
    %1053 = vmatpush1.msra.mxu0 %v628
    %1054 = vmatprep.subr.mxu0 0.0
    %1055 = vmatpush1.msra.mxu0 %v629
    %1056 = vmatprep.subr.mxu0 0.0
    %1057 = vmatpush1.msra.mxu0 %v630
    %1058 = vmatprep.subr.mxu0 0.0
    %1059 = vmatpush1.msra.mxu0 %v631
    %1060 = vmatprep.subr.mxu0 0.0
    %1061 = vmatpush1.msra.mxu0 0.0
    %1062 = vmatprep.subr.mxu0 0.0
    %1063 = vmatpush1.msra.mxu0 0.0
    %1064 = vmatprep.subr.mxu0 0.0
    %1065 = vmatpush1.msra.mxu0 0.0
    %1066 = vmatprep.subr.mxu0 0.0
    %1067 = vmatpush1.msra.mxu0 0.0
    %1068 = vmatprep.subr.mxu0 0.0
    %1069 = vmatpush1.msra.mxu0 0.0
    %1070 = vmatprep.subr.mxu0 0.0
    %1071 = vmatpush1.msra.mxu0 0.0
    %1072 = vmatprep.subr.mxu0 0.0
    %1073 = vmatpush1.msra.mxu0 0.0
    %1074 = vmatprep.subr.mxu0 0.0
    %1075 = vmatpush1.msra.mxu0 0.0
    %1076 = vmatprep.subr.mxu0 0.0
    %1077 = vmatpush1.msra.mxu0 0.0
    %1078 = vmatprep.subr.mxu0 0.0
    %1079 = vmatpush1.msra.mxu0 0.0
    %1080 = vmatprep.subr.mxu0 0.0
    %1081 = vmatpush1.msra.mxu0 0.0
    %1082 = vmatprep.subr.mxu0 0.0
    %1083 = vmatpush1.msra.mxu0 0.0
    %1084 = vmatprep.subr.mxu0 0.0
    %1085 = vmatpush1.msra.mxu0 0.0
    %1086 = vmatprep.subr.mxu0 0.0
    %1087 = vmatpush1.msra.mxu0 0.0
    %1088 = vmatprep.subr.mxu0 0.0
    %1089 = vmatpush1.msra.mxu0 0.0
    %1090 = vmatprep.subr.mxu0 0.0
    %1091 = vmatpush1.msra.mxu0 0.0
    %1092 = vmatprep.subr.mxu0 0.0
    %1093 = vmatpush1.msra.mxu0 0.0
    %1094 = vmatprep.subr.mxu0 0.0
    %1095 = vmatpush1.msra.mxu0 0.0
    %1096 = vmatprep.subr.mxu0 0.0
    %1097 = vmatpush1.msra.mxu0 0.0
    %1098 = vmatprep.subr.mxu0 0.0
    %1099 = vmatpush1.msra.mxu0 0.0
    %1100 = vmatprep.subr.mxu0 0.0
    %1101 = vmatpush1.msra.mxu0 0.0
    %1102 = vmatprep.subr.mxu0 0.0
    %1103 = vmatpush1.msra.mxu0 0.0
    %1104 = vmatprep.subr.mxu0 0.0
    %1105 = vmatpush1.msra.mxu0 0.0
    %1106 = vmatprep.subr.mxu0 0.0
    %1107 = vmatpush1.msra.mxu0 0.0
    %1108 = vmatprep.subr.mxu0 0.0
    %1109 = vmatpush1.msra.mxu0 0.0
    %1110 = vmatprep.subr.mxu0 0.0
    %1111 = vmatpush1.msra.mxu0 0.0
    %1112 = vmatprep.subr.mxu0 0.0
    %1113 = vmatpush1.msra.mxu0 0.0
    %1114 = vmatprep.subr.mxu0 0.0
    %1115 = vmatpush1.msra.mxu0 0.0
    %1116 = vmatprep.mubr.f32.mxu0 0.0
    %1117 = vmatmul.mubr.f32.gmra.mrb[0].mxu0 %v1050
    %v1118 = vpop.f32.mrb[0].mxu0
    %v1119 = vadd.f32 0.0, %v1118
    %v1120 = vpop.f32.mrb[0].mxu0
    %1121 = vdwg.mxu0
    %1123 = vrot.lane.b32.xlu0 %v1046, 32
    %v1124 = vpop.permute.xlu0 %1123
    %v1125 = vsel %vm369, %v1124, 0
    %1127 = vmatprep.subr.mxu0 0.0
    %1128 = vmatpush1.msra.mxu0 %v632
    %1129 = vmatprep.subr.mxu0 0.0
    %1130 = vmatpush1.msra.mxu0 %v633
    %1131 = vmatprep.subr.mxu0 0.0
    %1132 = vmatpush1.msra.mxu0 %v634
    %1133 = vmatprep.subr.mxu0 0.0
    %1134 = vmatpush1.msra.mxu0 %v635
    %1135 = vmatprep.subr.mxu0 0.0
    %1136 = vmatpush1.msra.mxu0 0.0
    %1137 = vmatprep.subr.mxu0 0.0
    %1138 = vmatpush1.msra.mxu0 0.0
    %1139 = vmatprep.subr.mxu0 0.0
    %1140 = vmatpush1.msra.mxu0 0.0
    %1141 = vmatprep.subr.mxu0 0.0
    %1142 = vmatpush1.msra.mxu0 0.0
    %1143 = vmatprep.subr.mxu0 0.0
    %1144 = vmatpush1.msra.mxu0 0.0
    %1145 = vmatprep.subr.mxu0 0.0
    %1146 = vmatpush1.msra.mxu0 0.0
    %1147 = vmatprep.subr.mxu0 0.0
    %1148 = vmatpush1.msra.mxu0 0.0
    %1149 = vmatprep.subr.mxu0 0.0
    %1150 = vmatpush1.msra.mxu0 0.0
    %1151 = vmatprep.subr.mxu0 0.0
    %1152 = vmatpush1.msra.mxu0 0.0
    %1153 = vmatprep.subr.mxu0 0.0
    %1154 = vmatpush1.msra.mxu0 0.0
    %1155 = vmatprep.subr.mxu0 0.0
    %1156 = vmatpush1.msra.mxu0 0.0
    %1157 = vmatprep.subr.mxu0 0.0
    %1158 = vmatpush1.msra.mxu0 0.0
    %1159 = vmatprep.subr.mxu0 0.0
    %1160 = vmatpush1.msra.mxu0 0.0
    %1161 = vmatprep.subr.mxu0 0.0
    %1162 = vmatpush1.msra.mxu0 0.0
    %1163 = vmatprep.subr.mxu0 0.0
    %1164 = vmatpush1.msra.mxu0 0.0
    %1165 = vmatprep.subr.mxu0 0.0
    %1166 = vmatpush1.msra.mxu0 0.0
    %1167 = vmatprep.subr.mxu0 0.0
    %1168 = vmatpush1.msra.mxu0 0.0
    %1169 = vmatprep.subr.mxu0 0.0
    %1170 = vmatpush1.msra.mxu0 0.0
    %1171 = vmatprep.subr.mxu0 0.0
    %1172 = vmatpush1.msra.mxu0 0.0
    %1173 = vmatprep.subr.mxu0 0.0
    %1174 = vmatpush1.msra.mxu0 0.0
    %1175 = vmatprep.subr.mxu0 0.0
    %1176 = vmatpush1.msra.mxu0 0.0
    %1177 = vmatprep.subr.mxu0 0.0
    %1178 = vmatpush1.msra.mxu0 0.0
    %1179 = vmatprep.subr.mxu0 0.0
    %1180 = vmatpush1.msra.mxu0 0.0
    %1181 = vmatprep.subr.mxu0 0.0
    %1182 = vmatpush1.msra.mxu0 0.0
    %1183 = vmatprep.subr.mxu0 0.0
    %1184 = vmatpush1.msra.mxu0 0.0
    %1185 = vmatprep.subr.mxu0 0.0
    %1186 = vmatpush1.msra.mxu0 0.0
    %1187 = vmatprep.subr.mxu0 0.0
    %1188 = vmatpush1.msra.mxu0 0.0
    %1189 = vmatprep.subr.mxu0 0.0
    %1190 = vmatpush1.msra.mxu0 0.0
    %1191 = vmatprep.mubr.f32.mxu0 0.0
    %1192 = vmatmul.mubr.f32.gmra.mrb[0].mxu0 %v1125
    %v1193 = vpop.f32.mrb[0].mxu0
    %v1194 = vadd.f32 0.0, %v1193
    %v1195 = vpop.f32.mrb[0].mxu0
    %1196 = vdwg.mxu0
    %v1197 = vadd.f32 %v471, %v1119
    %v1198 = vadd.f32 %v600, %v1194
    %v1199 = vadd.f32 %v1197, %v788
    %v1200 = vadd.f32 %v1198, %v792
    %v1201 = vxor.u32 %v1199, 2147483648
    %v1202 = vxor.u32 %v1200, 2147483648
    %v1203 = vmul.f32 %v1201, 1.442695
    %v1204 = vpow.pop %v1203
    %v1205 = vmul.f32 %v1202, 1.442695
    %v1206 = vpow.pop %v1205
    %v1207 = vadd.f32 %v1204, 1.0
    %v1208 = vadd.f32 %v1206, 1.0
    %v1209 = vrcp.pop %v1207
    %v1210 = vmul.f32 1.0, %v1209
    %v1211 = vrcp.pop %v1208
    %v1212 = vmul.f32 1.0, %v1211
    %v1213 = vtanh.pop %v1199
    %v1214 = vtanh.pop %v1200
    %v1215 = vmul.f32 %v1210, %v1033
    %v1216 = vmul.f32 %v1212, %v1034
    %1219 = vrot.lane.b32.xlu0 %v1213, 64
    %v1220 = vpop.permute.xlu0 %1219
    %1221 = vrot.lane.b32.xlu0 %v1214, 64
    %v1222 = vpop.permute.xlu0 %1221
    %v1225 = vmul.f32 %v1210, %v1220
    %v1226 = vmul.f32 %v1212, %v1222
    %1229 = vrot.lane.b32.xlu0 %v1225, 32
    %v1230 = vpop.permute.xlu0 %1229
    %1231 = vrot.lane.b32.xlu0 %v1226, 32
    %v1232 = vpop.permute.xlu0 %1231
    %v1235 = vadd.f32 %v1215, %v1230
    %v1236 = vadd.f32 %v1216, %v1232
    %v1237 = vtanh.pop %v1235
    %v1238 = vtanh.pop %v1236
    %1241 = vrot.lane.b32.xlu0 %v1237, 64
    %v1242 = vpop.permute.xlu0 %1241
    %1243 = vrot.lane.b32.xlu0 %v1238, 64
    %v1244 = vpop.permute.xlu0 %1243
    %v1247 = vmul.f32 %v1210, %v1242
    %v1248 = vmul.f32 %v1212, %v1244
    %1250 = vrot.lane.b32.xlu0 %v1247, 32
    %v1251 = vpop.permute.xlu0 %1250
    %v1252 = vsel %vm369, %v1251, 0
    %1254 = vmatprep.subr.mxu0 0.0
    %1255 = vmatpush1.msra.mxu0 %v628
    %1256 = vmatprep.subr.mxu0 0.0
    %1257 = vmatpush1.msra.mxu0 %v629
    %1258 = vmatprep.subr.mxu0 0.0
    %1259 = vmatpush1.msra.mxu0 %v630
    %1260 = vmatprep.subr.mxu0 0.0
    %1261 = vmatpush1.msra.mxu0 %v631
    %1262 = vmatprep.subr.mxu0 0.0
    %1263 = vmatpush1.msra.mxu0 0.0
    %1264 = vmatprep.subr.mxu0 0.0
    %1265 = vmatpush1.msra.mxu0 0.0
    %1266 = vmatprep.subr.mxu0 0.0
    %1267 = vmatpush1.msra.mxu0 0.0
    %1268 = vmatprep.subr.mxu0 0.0
    %1269 = vmatpush1.msra.mxu0 0.0
    %1270 = vmatprep.subr.mxu0 0.0
    %1271 = vmatpush1.msra.mxu0 0.0
    %1272 = vmatprep.subr.mxu0 0.0
    %1273 = vmatpush1.msra.mxu0 0.0
    %1274 = vmatprep.subr.mxu0 0.0
    %1275 = vmatpush1.msra.mxu0 0.0
    %1276 = vmatprep.subr.mxu0 0.0
    %1277 = vmatpush1.msra.mxu0 0.0
    %1278 = vmatprep.subr.mxu0 0.0
    %1279 = vmatpush1.msra.mxu0 0.0
    %1280 = vmatprep.subr.mxu0 0.0
    %1281 = vmatpush1.msra.mxu0 0.0
    %1282 = vmatprep.subr.mxu0 0.0
    %1283 = vmatpush1.msra.mxu0 0.0
    %1284 = vmatprep.subr.mxu0 0.0
    %1285 = vmatpush1.msra.mxu0 0.0
    %1286 = vmatprep.subr.mxu0 0.0
    %1287 = vmatpush1.msra.mxu0 0.0
    %1288 = vmatprep.subr.mxu0 0.0
    %1289 = vmatpush1.msra.mxu0 0.0
    %1290 = vmatprep.subr.mxu0 0.0
    %1291 = vmatpush1.msra.mxu0 0.0
    %1292 = vmatprep.subr.mxu0 0.0
    %1293 = vmatpush1.msra.mxu0 0.0
    %1294 = vmatprep.subr.mxu0 0.0
    %1295 = vmatpush1.msra.mxu0 0.0
    %1296 = vmatprep.subr.mxu0 0.0
    %1297 = vmatpush1.msra.mxu0 0.0
    %1298 = vmatprep.subr.mxu0 0.0
    %1299 = vmatpush1.msra.mxu0 0.0
    %1300 = vmatprep.subr.mxu0 0.0
    %1301 = vmatpush1.msra.mxu0 0.0
    %1302 = vmatprep.subr.mxu0 0.0
    %1303 = vmatpush1.msra.mxu0 0.0
    %1304 = vmatprep.subr.mxu0 0.0
    %1305 = vmatpush1.msra.mxu0 0.0
    %1306 = vmatprep.subr.mxu0 0.0
    %1307 = vmatpush1.msra.mxu0 0.0
    %1308 = vmatprep.subr.mxu0 0.0
    %1309 = vmatpush1.msra.mxu0 0.0
    %1310 = vmatprep.subr.mxu0 0.0
    %1311 = vmatpush1.msra.mxu0 0.0
    %1312 = vmatprep.subr.mxu0 0.0
    %1313 = vmatpush1.msra.mxu0 0.0
    %1314 = vmatprep.subr.mxu0 0.0
    %1315 = vmatpush1.msra.mxu0 0.0
    %1316 = vmatprep.subr.mxu0 0.0
    %1317 = vmatpush1.msra.mxu0 0.0
    %1318 = vmatprep.mubr.f32.mxu0 0.0
    %1319 = vmatmul.mubr.f32.gmra.mrb[0].mxu0 %v1252
    %v1320 = vpop.f32.mrb[0].mxu0
    %v1321 = vadd.f32 0.0, %v1320
    %v1322 = vpop.f32.mrb[0].mxu0
    %1323 = vdwg.mxu0
    %1325 = vrot.lane.b32.xlu0 %v1248, 32
    %v1326 = vpop.permute.xlu0 %1325
    %v1327 = vsel %vm369, %v1326, 0
    %1329 = vmatprep.subr.mxu0 0.0
    %1330 = vmatpush1.msra.mxu0 %v632
    %1331 = vmatprep.subr.mxu0 0.0
    %1332 = vmatpush1.msra.mxu0 %v633
    %1333 = vmatprep.subr.mxu0 0.0
    %1334 = vmatpush1.msra.mxu0 %v634
    %1335 = vmatprep.subr.mxu0 0.0
    %1336 = vmatpush1.msra.mxu0 %v635
    %1337 = vmatprep.subr.mxu0 0.0
    %1338 = vmatpush1.msra.mxu0 0.0
    %1339 = vmatprep.subr.mxu0 0.0
    %1340 = vmatpush1.msra.mxu0 0.0
    %1341 = vmatprep.subr.mxu0 0.0
    %1342 = vmatpush1.msra.mxu0 0.0
    %1343 = vmatprep.subr.mxu0 0.0
    %1344 = vmatpush1.msra.mxu0 0.0
    %1345 = vmatprep.subr.mxu0 0.0
    %1346 = vmatpush1.msra.mxu0 0.0
    %1347 = vmatprep.subr.mxu0 0.0
    %1348 = vmatpush1.msra.mxu0 0.0
    %1349 = vmatprep.subr.mxu0 0.0
    %1350 = vmatpush1.msra.mxu0 0.0
    %1351 = vmatprep.subr.mxu0 0.0
    %1352 = vmatpush1.msra.mxu0 0.0
    %1353 = vmatprep.subr.mxu0 0.0
    %1354 = vmatpush1.msra.mxu0 0.0
    %1355 = vmatprep.subr.mxu0 0.0
    %1356 = vmatpush1.msra.mxu0 0.0
    %1357 = vmatprep.subr.mxu0 0.0
    %1358 = vmatpush1.msra.mxu0 0.0
    %1359 = vmatprep.subr.mxu0 0.0
    %1360 = vmatpush1.msra.mxu0 0.0
    %1361 = vmatprep.subr.mxu0 0.0
    %1362 = vmatpush1.msra.mxu0 0.0
    %1363 = vmatprep.subr.mxu0 0.0
    %1364 = vmatpush1.msra.mxu0 0.0
    %1365 = vmatprep.subr.mxu0 0.0
    %1366 = vmatpush1.msra.mxu0 0.0
    %1367 = vmatprep.subr.mxu0 0.0
    %1368 = vmatpush1.msra.mxu0 0.0
    %1369 = vmatprep.subr.mxu0 0.0
    %1370 = vmatpush1.msra.mxu0 0.0
    %1371 = vmatprep.subr.mxu0 0.0
    %1372 = vmatpush1.msra.mxu0 0.0
    %1373 = vmatprep.subr.mxu0 0.0
    %1374 = vmatpush1.msra.mxu0 0.0
    %1375 = vmatprep.subr.mxu0 0.0
    %1376 = vmatpush1.msra.mxu0 0.0
    %1377 = vmatprep.subr.mxu0 0.0
    %1378 = vmatpush1.msra.mxu0 0.0
    %1379 = vmatprep.subr.mxu0 0.0
    %1380 = vmatpush1.msra.mxu0 0.0
    %1381 = vmatprep.subr.mxu0 0.0
    %1382 = vmatpush1.msra.mxu0 0.0
    %1383 = vmatprep.subr.mxu0 0.0
    %1384 = vmatpush1.msra.mxu0 0.0
    %1385 = vmatprep.subr.mxu0 0.0
    %1386 = vmatpush1.msra.mxu0 0.0
    %1387 = vmatprep.subr.mxu0 0.0
    %1388 = vmatpush1.msra.mxu0 0.0
    %1389 = vmatprep.subr.mxu0 0.0
    %1390 = vmatpush1.msra.mxu0 0.0
    %1391 = vmatprep.subr.mxu0 0.0
    %1392 = vmatpush1.msra.mxu0 0.0
    %1393 = vmatprep.mubr.f32.mxu0 0.0
    %1394 = vmatmul.mubr.f32.gmra.mrb[0].mxu0 %v1327
    %v1395 = vpop.f32.mrb[0].mxu0
    %v1396 = vadd.f32 0.0, %v1395
    %v1397 = vpop.f32.mrb[0].mxu0
    %1398 = vdwg.mxu0
    %v1399 = vadd.f32 %v476, %v1321
    %v1400 = vadd.f32 %v605, %v1396
    %v1401 = vadd.f32 %v1399, %v788
    %v1402 = vadd.f32 %v1400, %v792
    %v1403 = vxor.u32 %v1401, 2147483648
    %v1404 = vxor.u32 %v1402, 2147483648
    %v1405 = vmul.f32 %v1403, 1.442695
    %v1406 = vpow.pop %v1405
    %v1407 = vmul.f32 %v1404, 1.442695
    %v1408 = vpow.pop %v1407
    %v1409 = vadd.f32 %v1406, 1.0
    %v1410 = vadd.f32 %v1408, 1.0
    %v1411 = vrcp.pop %v1409
    %v1412 = vmul.f32 1.0, %v1411
    %v1413 = vrcp.pop %v1410
    %v1414 = vmul.f32 1.0, %v1413
    %v1415 = vtanh.pop %v1401
    %v1416 = vtanh.pop %v1402
    %v1417 = vmul.f32 %v1412, %v1235
    %v1418 = vmul.f32 %v1414, %v1236
    %1421 = vrot.lane.b32.xlu0 %v1415, 64
    %v1422 = vpop.permute.xlu0 %1421
    %1423 = vrot.lane.b32.xlu0 %v1416, 64
    %v1424 = vpop.permute.xlu0 %1423
    %v1427 = vmul.f32 %v1412, %v1422
    %v1428 = vmul.f32 %v1414, %v1424
    %1431 = vrot.lane.b32.xlu0 %v1427, 32
    %v1432 = vpop.permute.xlu0 %1431
    %1433 = vrot.lane.b32.xlu0 %v1428, 32
    %v1434 = vpop.permute.xlu0 %1433
    %v1437 = vadd.f32 %v1417, %v1432
    %v1438 = vadd.f32 %v1418, %v1434
    %v1439 = vtanh.pop %v1437
    %v1440 = vtanh.pop %v1438
    %1443 = vrot.lane.b32.xlu0 %v1439, 64
    %v1444 = vpop.permute.xlu0 %1443
    %1445 = vrot.lane.b32.xlu0 %v1440, 64
    %v1446 = vpop.permute.xlu0 %1445
    %v1449 = vmul.f32 %v1412, %v1444
    %v1450 = vmul.f32 %v1414, %v1446
    %1452 = vrot.lane.b32.xlu0 %v1449, 32
    %v1453 = vpop.permute.xlu0 %1452
    %v1454 = vsel %vm369, %v1453, 0
    %1456 = vmatprep.subr.mxu0 0.0
    %1457 = vmatpush1.msra.mxu0 %v628
    %1458 = vmatprep.subr.mxu0 0.0
    %1459 = vmatpush1.msra.mxu0 %v629
    %1460 = vmatprep.subr.mxu0 0.0
    %1461 = vmatpush1.msra.mxu0 %v630
    %1462 = vmatprep.subr.mxu0 0.0
    %1463 = vmatpush1.msra.mxu0 %v631
    %1464 = vmatprep.subr.mxu0 0.0
    %1465 = vmatpush1.msra.mxu0 0.0
    %1466 = vmatprep.subr.mxu0 0.0
    %1467 = vmatpush1.msra.mxu0 0.0
    %1468 = vmatprep.subr.mxu0 0.0
    %1469 = vmatpush1.msra.mxu0 0.0
    %1470 = vmatprep.subr.mxu0 0.0
    %1471 = vmatpush1.msra.mxu0 0.0
    %1472 = vmatprep.subr.mxu0 0.0
    %1473 = vmatpush1.msra.mxu0 0.0
    %1474 = vmatprep.subr.mxu0 0.0
    %1475 = vmatpush1.msra.mxu0 0.0
    %1476 = vmatprep.subr.mxu0 0.0
    %1477 = vmatpush1.msra.mxu0 0.0
    %1478 = vmatprep.subr.mxu0 0.0
    %1479 = vmatpush1.msra.mxu0 0.0
    %1480 = vmatprep.subr.mxu0 0.0
    %1481 = vmatpush1.msra.mxu0 0.0
    %1482 = vmatprep.subr.mxu0 0.0
    %1483 = vmatpush1.msra.mxu0 0.0
    %1484 = vmatprep.subr.mxu0 0.0
    %1485 = vmatpush1.msra.mxu0 0.0
    %1486 = vmatprep.subr.mxu0 0.0
    %1487 = vmatpush1.msra.mxu0 0.0
    %1488 = vmatprep.subr.mxu0 0.0
    %1489 = vmatpush1.msra.mxu0 0.0
    %1490 = vmatprep.subr.mxu0 0.0
    %1491 = vmatpush1.msra.mxu0 0.0
    %1492 = vmatprep.subr.mxu0 0.0
    %1493 = vmatpush1.msra.mxu0 0.0
    %1494 = vmatprep.subr.mxu0 0.0
    %1495 = vmatpush1.msra.mxu0 0.0
    %1496 = vmatprep.subr.mxu0 0.0
    %1497 = vmatpush1.msra.mxu0 0.0
    %1498 = vmatprep.subr.mxu0 0.0
    %1499 = vmatpush1.msra.mxu0 0.0
    %1500 = vmatprep.subr.mxu0 0.0
    %1501 = vmatpush1.msra.mxu0 0.0
    %1502 = vmatprep.subr.mxu0 0.0
    %1503 = vmatpush1.msra.mxu0 0.0
    %1504 = vmatprep.subr.mxu0 0.0
    %1505 = vmatpush1.msra.mxu0 0.0
    %1506 = vmatprep.subr.mxu0 0.0
    %1507 = vmatpush1.msra.mxu0 0.0
    %1508 = vmatprep.subr.mxu0 0.0
    %1509 = vmatpush1.msra.mxu0 0.0
    %1510 = vmatprep.subr.mxu0 0.0
    %1511 = vmatpush1.msra.mxu0 0.0
    %1512 = vmatprep.subr.mxu0 0.0
    %1513 = vmatpush1.msra.mxu0 0.0
    %1514 = vmatprep.subr.mxu0 0.0
    %1515 = vmatpush1.msra.mxu0 0.0
    %1516 = vmatprep.subr.mxu0 0.0
    %1517 = vmatpush1.msra.mxu0 0.0
    %1518 = vmatprep.subr.mxu0 0.0
    %1519 = vmatpush1.msra.mxu0 0.0
    %1520 = vmatprep.mubr.f32.mxu0 0.0
    %1521 = vmatmul.mubr.f32.gmra.mrb[0].mxu0 %v1454
    %v1522 = vpop.f32.mrb[0].mxu0
    %v1523 = vadd.f32 0.0, %v1522
    %v1524 = vpop.f32.mrb[0].mxu0
    %1525 = vdwg.mxu0
    %1527 = vrot.lane.b32.xlu0 %v1450, 32
    %v1528 = vpop.permute.xlu0 %1527
    %v1529 = vsel %vm369, %v1528, 0
    %1531 = vmatprep.subr.mxu0 0.0
    %1532 = vmatpush1.msra.mxu0 %v632
    %1533 = vmatprep.subr.mxu0 0.0
    %1534 = vmatpush1.msra.mxu0 %v633
    %1535 = vmatprep.subr.mxu0 0.0
    %1536 = vmatpush1.msra.mxu0 %v634
    %1537 = vmatprep.subr.mxu0 0.0
    %1538 = vmatpush1.msra.mxu0 %v635
    %1539 = vmatprep.subr.mxu0 0.0
    %1540 = vmatpush1.msra.mxu0 0.0
    %1541 = vmatprep.subr.mxu0 0.0
    %1542 = vmatpush1.msra.mxu0 0.0
    %1543 = vmatprep.subr.mxu0 0.0
    %1544 = vmatpush1.msra.mxu0 0.0
    %1545 = vmatprep.subr.mxu0 0.0
    %1546 = vmatpush1.msra.mxu0 0.0
    %1547 = vmatprep.subr.mxu0 0.0
    %1548 = vmatpush1.msra.mxu0 0.0
    %1549 = vmatprep.subr.mxu0 0.0
    %1550 = vmatpush1.msra.mxu0 0.0
    %1551 = vmatprep.subr.mxu0 0.0
    %1552 = vmatpush1.msra.mxu0 0.0
    %1553 = vmatprep.subr.mxu0 0.0
    %1554 = vmatpush1.msra.mxu0 0.0
    %1555 = vmatprep.subr.mxu0 0.0
    %1556 = vmatpush1.msra.mxu0 0.0
    %1557 = vmatprep.subr.mxu0 0.0
    %1558 = vmatpush1.msra.mxu0 0.0
    %1559 = vmatprep.subr.mxu0 0.0
    %1560 = vmatpush1.msra.mxu0 0.0
    %1561 = vmatprep.subr.mxu0 0.0
    %1562 = vmatpush1.msra.mxu0 0.0
    %1563 = vmatprep.subr.mxu0 0.0
    %1564 = vmatpush1.msra.mxu0 0.0
    %1565 = vmatprep.subr.mxu0 0.0
    %1566 = vmatpush1.msra.mxu0 0.0
    %1567 = vmatprep.subr.mxu0 0.0
    %1568 = vmatpush1.msra.mxu0 0.0
    %1569 = vmatprep.subr.mxu0 0.0
    %1570 = vmatpush1.msra.mxu0 0.0
    %1571 = vmatprep.subr.mxu0 0.0
    %1572 = vmatpush1.msra.mxu0 0.0
    %1573 = vmatprep.subr.mxu0 0.0
    %1574 = vmatpush1.msra.mxu0 0.0
    %1575 = vmatprep.subr.mxu0 0.0
    %1576 = vmatpush1.msra.mxu0 0.0
    %1577 = vmatprep.subr.mxu0 0.0
    %1578 = vmatpush1.msra.mxu0 0.0
    %1579 = vmatprep.subr.mxu0 0.0
    %1580 = vmatpush1.msra.mxu0 0.0
    %1581 = vmatprep.subr.mxu0 0.0
    %1582 = vmatpush1.msra.mxu0 0.0
    %1583 = vmatprep.subr.mxu0 0.0
    %1584 = vmatpush1.msra.mxu0 0.0
    %1585 = vmatprep.subr.mxu0 0.0
    %1586 = vmatpush1.msra.mxu0 0.0
    %1587 = vmatprep.subr.mxu0 0.0
    %1588 = vmatpush1.msra.mxu0 0.0
    %1589 = vmatprep.subr.mxu0 0.0
    %1590 = vmatpush1.msra.mxu0 0.0
    %1591 = vmatprep.subr.mxu0 0.0
    %1592 = vmatpush1.msra.mxu0 0.0
    %1593 = vmatprep.subr.mxu0 0.0
    %1594 = vmatpush1.msra.mxu0 0.0
    %1595 = vmatprep.mubr.f32.mxu0 0.0
    %1596 = vmatmul.mubr.f32.gmra.mrb[0].mxu0 %v1529
    %v1597 = vpop.f32.mrb[0].mxu0
    %v1598 = vadd.f32 0.0, %v1597
    %v1599 = vpop.f32.mrb[0].mxu0
    %1600 = vdwg.mxu0
    %v1601 = vadd.f32 %v481, %v1523
    %v1602 = vadd.f32 %v610, %v1598
    %v1603 = vadd.f32 %v1601, %v788
    %v1604 = vadd.f32 %v1602, %v792
    %v1605 = vxor.u32 %v1603, 2147483648
    %v1606 = vxor.u32 %v1604, 2147483648
    %v1607 = vmul.f32 %v1605, 1.442695
    %v1608 = vpow.pop %v1607
    %v1609 = vmul.f32 %v1606, 1.442695
    %v1610 = vpow.pop %v1609
    %v1611 = vadd.f32 %v1608, 1.0
    %v1612 = vadd.f32 %v1610, 1.0
    %v1613 = vrcp.pop %v1611
    %v1614 = vmul.f32 1.0, %v1613
    %v1615 = vrcp.pop %v1612
    %v1616 = vmul.f32 1.0, %v1615
    %v1617 = vtanh.pop %v1603
    %v1618 = vtanh.pop %v1604
    %v1619 = vmul.f32 %v1614, %v1437
    %v1620 = vmul.f32 %v1616, %v1438
    %1623 = vrot.lane.b32.xlu0 %v1617, 64
    %v1624 = vpop.permute.xlu0 %1623
    %1625 = vrot.lane.b32.xlu0 %v1618, 64
    %v1626 = vpop.permute.xlu0 %1625
    %v1629 = vmul.f32 %v1614, %v1624
    %v1630 = vmul.f32 %v1616, %v1626
    %1633 = vrot.lane.b32.xlu0 %v1629, 32
    %v1634 = vpop.permute.xlu0 %1633
    %1635 = vrot.lane.b32.xlu0 %v1630, 32
    %v1636 = vpop.permute.xlu0 %1635
    %v1639 = vadd.f32 %v1619, %v1634
    %v1640 = vadd.f32 %v1620, %v1636
    %v1641 = vtanh.pop %v1639
    %v1642 = vtanh.pop %v1640
    %1645 = vrot.lane.b32.xlu0 %v1641, 64
    %v1646 = vpop.permute.xlu0 %1645
    %1647 = vrot.lane.b32.xlu0 %v1642, 64
    %v1648 = vpop.permute.xlu0 %1647
    %v1651 = vmul.f32 %v1614, %v1646
    %v1652 = vmul.f32 %v1616, %v1648
    %1654 = vrot.lane.b32.xlu0 %v1651, 32
    %v1655 = vpop.permute.xlu0 %1654
    %v1656 = vsel %vm369, %v1655, 0
    %1658 = vmatprep.subr.mxu0 0.0
    %1659 = vmatpush1.msra.mxu0 %v628
    %1660 = vmatprep.subr.mxu0 0.0
    %1661 = vmatpush1.msra.mxu0 %v629
    %1662 = vmatprep.subr.mxu0 0.0
    %1663 = vmatpush1.msra.mxu0 %v630
    %1664 = vmatprep.subr.mxu0 0.0
    %1665 = vmatpush1.msra.mxu0 %v631
    %1666 = vmatprep.subr.mxu0 0.0
    %1667 = vmatpush1.msra.mxu0 0.0
    %1668 = vmatprep.subr.mxu0 0.0
    %1669 = vmatpush1.msra.mxu0 0.0
    %1670 = vmatprep.subr.mxu0 0.0
    %1671 = vmatpush1.msra.mxu0 0.0
    %1672 = vmatprep.subr.mxu0 0.0
    %1673 = vmatpush1.msra.mxu0 0.0
    %1674 = vmatprep.subr.mxu0 0.0
    %1675 = vmatpush1.msra.mxu0 0.0
    %1676 = vmatprep.subr.mxu0 0.0
    %1677 = vmatpush1.msra.mxu0 0.0
    %1678 = vmatprep.subr.mxu0 0.0
    %1679 = vmatpush1.msra.mxu0 0.0
    %1680 = vmatprep.subr.mxu0 0.0
    %1681 = vmatpush1.msra.mxu0 0.0
    %1682 = vmatprep.subr.mxu0 0.0
    %1683 = vmatpush1.msra.mxu0 0.0
    %1684 = vmatprep.subr.mxu0 0.0
    %1685 = vmatpush1.msra.mxu0 0.0
    %1686 = vmatprep.subr.mxu0 0.0
    %1687 = vmatpush1.msra.mxu0 0.0
    %1688 = vmatprep.subr.mxu0 0.0
    %1689 = vmatpush1.msra.mxu0 0.0
    %1690 = vmatprep.subr.mxu0 0.0
    %1691 = vmatpush1.msra.mxu0 0.0
    %1692 = vmatprep.subr.mxu0 0.0
    %1693 = vmatpush1.msra.mxu0 0.0
    %1694 = vmatprep.subr.mxu0 0.0
    %1695 = vmatpush1.msra.mxu0 0.0
    %1696 = vmatprep.subr.mxu0 0.0
    %1697 = vmatpush1.msra.mxu0 0.0
    %1698 = vmatprep.subr.mxu0 0.0
    %1699 = vmatpush1.msra.mxu0 0.0
    %1700 = vmatprep.subr.mxu0 0.0
    %1701 = vmatpush1.msra.mxu0 0.0
    %1702 = vmatprep.subr.mxu0 0.0
    %1703 = vmatpush1.msra.mxu0 0.0
    %1704 = vmatprep.subr.mxu0 0.0
    %1705 = vmatpush1.msra.mxu0 0.0
    %1706 = vmatprep.subr.mxu0 0.0
    %1707 = vmatpush1.msra.mxu0 0.0
    %1708 = vmatprep.subr.mxu0 0.0
    %1709 = vmatpush1.msra.mxu0 0.0
    %1710 = vmatprep.subr.mxu0 0.0
    %1711 = vmatpush1.msra.mxu0 0.0
    %1712 = vmatprep.subr.mxu0 0.0
    %1713 = vmatpush1.msra.mxu0 0.0
    %1714 = vmatprep.subr.mxu0 0.0
    %1715 = vmatpush1.msra.mxu0 0.0
    %1716 = vmatprep.subr.mxu0 0.0
    %1717 = vmatpush1.msra.mxu0 0.0
    %1718 = vmatprep.subr.mxu0 0.0
    %1719 = vmatpush1.msra.mxu0 0.0
    %1720 = vmatprep.subr.mxu0 0.0
    %1721 = vmatpush1.msra.mxu0 0.0
    %1722 = vmatprep.mubr.f32.mxu0 0.0
    %1723 = vmatmul.mubr.f32.gmra.mrb[0].mxu0 %v1656
    %v1724 = vpop.f32.mrb[0].mxu0
    %v1725 = vadd.f32 0.0, %v1724
    %v1726 = vpop.f32.mrb[0].mxu0
    %1727 = vdwg.mxu0
    %1729 = vrot.lane.b32.xlu0 %v1652, 32
    %v1730 = vpop.permute.xlu0 %1729
    %v1731 = vsel %vm369, %v1730, 0
    %1733 = vmatprep.subr.mxu0 0.0
    %1734 = vmatpush1.msra.mxu0 %v632
    %1735 = vmatprep.subr.mxu0 0.0
    %1736 = vmatpush1.msra.mxu0 %v633
    %1737 = vmatprep.subr.mxu0 0.0
    %1738 = vmatpush1.msra.mxu0 %v634
    %1739 = vmatprep.subr.mxu0 0.0
    %1740 = vmatpush1.msra.mxu0 %v635
    %1741 = vmatprep.subr.mxu0 0.0
    %1742 = vmatpush1.msra.mxu0 0.0
    %1743 = vmatprep.subr.mxu0 0.0
    %1744 = vmatpush1.msra.mxu0 0.0
    %1745 = vmatprep.subr.mxu0 0.0
    %1746 = vmatpush1.msra.mxu0 0.0
    %1747 = vmatprep.subr.mxu0 0.0
    %1748 = vmatpush1.msra.mxu0 0.0
    %1749 = vmatprep.subr.mxu0 0.0
    %1750 = vmatpush1.msra.mxu0 0.0
    %1751 = vmatprep.subr.mxu0 0.0
    %1752 = vmatpush1.msra.mxu0 0.0
    %1753 = vmatprep.subr.mxu0 0.0
    %1754 = vmatpush1.msra.mxu0 0.0
    %1755 = vmatprep.subr.mxu0 0.0
    %1756 = vmatpush1.msra.mxu0 0.0
    %1757 = vmatprep.subr.mxu0 0.0
    %1758 = vmatpush1.msra.mxu0 0.0
    %1759 = vmatprep.subr.mxu0 0.0
    %1760 = vmatpush1.msra.mxu0 0.0
    %1761 = vmatprep.subr.mxu0 0.0
    %1762 = vmatpush1.msra.mxu0 0.0
    %1763 = vmatprep.subr.mxu0 0.0
    %1764 = vmatpush1.msra.mxu0 0.0
    %1765 = vmatprep.subr.mxu0 0.0
    %1766 = vmatpush1.msra.mxu0 0.0
    %1767 = vmatprep.subr.mxu0 0.0
    %1768 = vmatpush1.msra.mxu0 0.0
    %1769 = vmatprep.subr.mxu0 0.0
    %1770 = vmatpush1.msra.mxu0 0.0
    %1771 = vmatprep.subr.mxu0 0.0
    %1772 = vmatpush1.msra.mxu0 0.0
    %1773 = vmatprep.subr.mxu0 0.0
    %1774 = vmatpush1.msra.mxu0 0.0
    %1775 = vmatprep.subr.mxu0 0.0
    %1776 = vmatpush1.msra.mxu0 0.0
    %1777 = vmatprep.subr.mxu0 0.0
    %1778 = vmatpush1.msra.mxu0 0.0
    %1779 = vmatprep.subr.mxu0 0.0
    %1780 = vmatpush1.msra.mxu0 0.0
    %1781 = vmatprep.subr.mxu0 0.0
    %1782 = vmatpush1.msra.mxu0 0.0
    %1783 = vmatprep.subr.mxu0 0.0
    %1784 = vmatpush1.msra.mxu0 0.0
    %1785 = vmatprep.subr.mxu0 0.0
    %1786 = vmatpush1.msra.mxu0 0.0
    %1787 = vmatprep.subr.mxu0 0.0
    %1788 = vmatpush1.msra.mxu0 0.0
    %1789 = vmatprep.subr.mxu0 0.0
    %1790 = vmatpush1.msra.mxu0 0.0
    %1791 = vmatprep.subr.mxu0 0.0
    %1792 = vmatpush1.msra.mxu0 0.0
    %1793 = vmatprep.subr.mxu0 0.0
    %1794 = vmatpush1.msra.mxu0 0.0
    %1795 = vmatprep.subr.mxu0 0.0
    %1796 = vmatpush1.msra.mxu0 0.0
    %1797 = vmatprep.mubr.f32.mxu0 0.0
    %1798 = vmatmul.mubr.f32.gmra.mrb[0].mxu0 %v1731
    %v1799 = vpop.f32.mrb[0].mxu0
    %v1800 = vadd.f32 0.0, %v1799
    %v1801 = vpop.f32.mrb[0].mxu0
    %1802 = vdwg.mxu0
    %v1803 = vadd.f32 %v486, %v1725
    %v1804 = vadd.f32 %v615, %v1800
    %v1805 = vadd.f32 %v1803, %v788
    %v1806 = vadd.f32 %v1804, %v792
    %v1807 = vxor.u32 %v1805, 2147483648
    %v1808 = vxor.u32 %v1806, 2147483648
    %v1809 = vmul.f32 %v1807, 1.442695
    %v1810 = vpow.pop %v1809
    %v1811 = vmul.f32 %v1808, 1.442695
    %v1812 = vpow.pop %v1811
    %v1813 = vadd.f32 %v1810, 1.0
    %v1814 = vadd.f32 %v1812, 1.0
    %v1815 = vrcp.pop %v1813
    %v1816 = vmul.f32 1.0, %v1815
    %v1817 = vrcp.pop %v1814
    %v1818 = vmul.f32 1.0, %v1817
    %v1819 = vtanh.pop %v1805
    %v1820 = vtanh.pop %v1806
    %v1821 = vmul.f32 %v1816, %v1639
    %v1822 = vmul.f32 %v1818, %v1640
    %1825 = vrot.lane.b32.xlu0 %v1819, 64
    %v1826 = vpop.permute.xlu0 %1825
    %1827 = vrot.lane.b32.xlu0 %v1820, 64
    %v1828 = vpop.permute.xlu0 %1827
    %v1831 = vmul.f32 %v1816, %v1826
    %v1832 = vmul.f32 %v1818, %v1828
    %1835 = vrot.lane.b32.xlu0 %v1831, 32
    %v1836 = vpop.permute.xlu0 %1835
    %1837 = vrot.lane.b32.xlu0 %v1832, 32
    %v1838 = vpop.permute.xlu0 %1837
    %v1841 = vadd.f32 %v1821, %v1836
    %v1842 = vadd.f32 %v1822, %v1838
    %v1843 = vtanh.pop %v1841
    %v1844 = vtanh.pop %v1842
    %1847 = vrot.lane.b32.xlu0 %v1843, 64
    %v1848 = vpop.permute.xlu0 %1847
    %1849 = vrot.lane.b32.xlu0 %v1844, 64
    %v1850 = vpop.permute.xlu0 %1849
    %v1853 = vmul.f32 %v1816, %v1848
    %v1854 = vmul.f32 %v1818, %v1850
    %1856 = vrot.lane.b32.xlu0 %v1853, 32
    %v1857 = vpop.permute.xlu0 %1856
    %v1858 = vsel %vm369, %v1857, 0
    %1860 = vmatprep.subr.mxu0 0.0
    %1861 = vmatpush1.msra.mxu0 %v628
    %1862 = vmatprep.subr.mxu0 0.0
    %1863 = vmatpush1.msra.mxu0 %v629
    %1864 = vmatprep.subr.mxu0 0.0
    %1865 = vmatpush1.msra.mxu0 %v630
    %1866 = vmatprep.subr.mxu0 0.0
    %1867 = vmatpush1.msra.mxu0 %v631
    %1868 = vmatprep.subr.mxu0 0.0
    %1869 = vmatpush1.msra.mxu0 0.0
    %1870 = vmatprep.subr.mxu0 0.0
    %1871 = vmatpush1.msra.mxu0 0.0
    %1872 = vmatprep.subr.mxu0 0.0
    %1873 = vmatpush1.msra.mxu0 0.0
    %1874 = vmatprep.subr.mxu0 0.0
    %1875 = vmatpush1.msra.mxu0 0.0
    %1876 = vmatprep.subr.mxu0 0.0
    %1877 = vmatpush1.msra.mxu0 0.0
    %1878 = vmatprep.subr.mxu0 0.0
    %1879 = vmatpush1.msra.mxu0 0.0
    %1880 = vmatprep.subr.mxu0 0.0
    %1881 = vmatpush1.msra.mxu0 0.0
    %1882 = vmatprep.subr.mxu0 0.0
    %1883 = vmatpush1.msra.mxu0 0.0
    %1884 = vmatprep.subr.mxu0 0.0
    %1885 = vmatpush1.msra.mxu0 0.0
    %1886 = vmatprep.subr.mxu0 0.0
    %1887 = vmatpush1.msra.mxu0 0.0
    %1888 = vmatprep.subr.mxu0 0.0
    %1889 = vmatpush1.msra.mxu0 0.0
    %1890 = vmatprep.subr.mxu0 0.0
    %1891 = vmatpush1.msra.mxu0 0.0
    %1892 = vmatprep.subr.mxu0 0.0
    %1893 = vmatpush1.msra.mxu0 0.0
    %1894 = vmatprep.subr.mxu0 0.0
    %1895 = vmatpush1.msra.mxu0 0.0
    %1896 = vmatprep.subr.mxu0 0.0
    %1897 = vmatpush1.msra.mxu0 0.0
    %1898 = vmatprep.subr.mxu0 0.0
    %1899 = vmatpush1.msra.mxu0 0.0
    %1900 = vmatprep.subr.mxu0 0.0
    %1901 = vmatpush1.msra.mxu0 0.0
    %1902 = vmatprep.subr.mxu0 0.0
    %1903 = vmatpush1.msra.mxu0 0.0
    %1904 = vmatprep.subr.mxu0 0.0
    %1905 = vmatpush1.msra.mxu0 0.0
    %1906 = vmatprep.subr.mxu0 0.0
    %1907 = vmatpush1.msra.mxu0 0.0
    %1908 = vmatprep.subr.mxu0 0.0
    %1909 = vmatpush1.msra.mxu0 0.0
    %1910 = vmatprep.subr.mxu0 0.0
    %1911 = vmatpush1.msra.mxu0 0.0
    %1912 = vmatprep.subr.mxu0 0.0
    %1913 = vmatpush1.msra.mxu0 0.0
    %1914 = vmatprep.subr.mxu0 0.0
    %1915 = vmatpush1.msra.mxu0 0.0
    %1916 = vmatprep.subr.mxu0 0.0
    %1917 = vmatpush1.msra.mxu0 0.0
    %1918 = vmatprep.subr.mxu0 0.0
    %1919 = vmatpush1.msra.mxu0 0.0
    %1920 = vmatprep.subr.mxu0 0.0
    %1921 = vmatpush1.msra.mxu0 0.0
    %1922 = vmatprep.subr.mxu0 0.0
    %1923 = vmatpush1.msra.mxu0 0.0
    %1924 = vmatprep.mubr.f32.mxu0 0.0
    %1925 = vmatmul.mubr.f32.gmra.mrb[0].mxu0 %v1858
    %v1926 = vpop.f32.mrb[0].mxu0
    %v1927 = vadd.f32 0.0, %v1926
    %v1928 = vpop.f32.mrb[0].mxu0
    %1929 = vdwg.mxu0
    %1931 = vrot.lane.b32.xlu0 %v1854, 32
    %v1932 = vpop.permute.xlu0 %1931
    %v1933 = vsel %vm369, %v1932, 0
    %1935 = vmatprep.subr.mxu0 0.0
    %1936 = vmatpush1.msra.mxu0 %v632
    %1937 = vmatprep.subr.mxu0 0.0
    %1938 = vmatpush1.msra.mxu0 %v633
    %1939 = vmatprep.subr.mxu0 0.0
    %1940 = vmatpush1.msra.mxu0 %v634
    %1941 = vmatprep.subr.mxu0 0.0
    %1942 = vmatpush1.msra.mxu0 %v635
    %1943 = vmatprep.subr.mxu0 0.0
    %1944 = vmatpush1.msra.mxu0 0.0
    %1945 = vmatprep.subr.mxu0 0.0
    %1946 = vmatpush1.msra.mxu0 0.0
    %1947 = vmatprep.subr.mxu0 0.0
    %1948 = vmatpush1.msra.mxu0 0.0
    %1949 = vmatprep.subr.mxu0 0.0
    %1950 = vmatpush1.msra.mxu0 0.0
    %1951 = vmatprep.subr.mxu0 0.0
    %1952 = vmatpush1.msra.mxu0 0.0
    %1953 = vmatprep.subr.mxu0 0.0
    %1954 = vmatpush1.msra.mxu0 0.0
    %1955 = vmatprep.subr.mxu0 0.0
    %1956 = vmatpush1.msra.mxu0 0.0
    %1957 = vmatprep.subr.mxu0 0.0
    %1958 = vmatpush1.msra.mxu0 0.0
    %1959 = vmatprep.subr.mxu0 0.0
    %1960 = vmatpush1.msra.mxu0 0.0
    %1961 = vmatprep.subr.mxu0 0.0
    %1962 = vmatpush1.msra.mxu0 0.0
    %1963 = vmatprep.subr.mxu0 0.0
    %1964 = vmatpush1.msra.mxu0 0.0
    %1965 = vmatprep.subr.mxu0 0.0
    %1966 = vmatpush1.msra.mxu0 0.0
    %1967 = vmatprep.subr.mxu0 0.0
    %1968 = vmatpush1.msra.mxu0 0.0
    %1969 = vmatprep.subr.mxu0 0.0
    %1970 = vmatpush1.msra.mxu0 0.0
    %1971 = vmatprep.subr.mxu0 0.0
    %1972 = vmatpush1.msra.mxu0 0.0
    %1973 = vmatprep.subr.mxu0 0.0
    %1974 = vmatpush1.msra.mxu0 0.0
    %1975 = vmatprep.subr.mxu0 0.0
    %1976 = vmatpush1.msra.mxu0 0.0
    %1977 = vmatprep.subr.mxu0 0.0
    %1978 = vmatpush1.msra.mxu0 0.0
    %1979 = vmatprep.subr.mxu0 0.0
    %1980 = vmatpush1.msra.mxu0 0.0
    %1981 = vmatprep.subr.mxu0 0.0
    %1982 = vmatpush1.msra.mxu0 0.0
    %1983 = vmatprep.subr.mxu0 0.0
    %1984 = vmatpush1.msra.mxu0 0.0
    %1985 = vmatprep.subr.mxu0 0.0
    %1986 = vmatpush1.msra.mxu0 0.0
    %1987 = vmatprep.subr.mxu0 0.0
    %1988 = vmatpush1.msra.mxu0 0.0
    %1989 = vmatprep.subr.mxu0 0.0
    %1990 = vmatpush1.msra.mxu0 0.0
    %1991 = vmatprep.subr.mxu0 0.0
    %1992 = vmatpush1.msra.mxu0 0.0
    %1993 = vmatprep.subr.mxu0 0.0
    %1994 = vmatpush1.msra.mxu0 0.0
    %1995 = vmatprep.subr.mxu0 0.0
    %1996 = vmatpush1.msra.mxu0 0.0
    %1997 = vmatprep.subr.mxu0 0.0
    %1998 = vmatpush1.msra.mxu0 0.0
    %1999 = vmatprep.mubr.f32.mxu0 0.0
    %2000 = vmatmul.mubr.f32.gmra.mrb[0].mxu0 %v1933
    %v2001 = vpop.f32.mrb[0].mxu0
    %v2002 = vadd.f32 0.0, %v2001
    %v2003 = vpop.f32.mrb[0].mxu0
    %2004 = vdwg.mxu0
    %v2005 = vadd.f32 %v491, %v1927
    %v2006 = vadd.f32 %v620, %v2002
    %v2007 = vadd.f32 %v2005, %v788
    %v2008 = vadd.f32 %v2006, %v792
    %v2009 = vxor.u32 %v2007, 2147483648
    %v2010 = vxor.u32 %v2008, 2147483648
    %v2011 = vmul.f32 %v2009, 1.442695
    %v2012 = vpow.pop %v2011
    %v2013 = vmul.f32 %v2010, 1.442695
    %v2014 = vpow.pop %v2013
    %v2015 = vadd.f32 %v2012, 1.0
    %v2016 = vadd.f32 %v2014, 1.0
    %v2017 = vrcp.pop %v2015
    %v2018 = vmul.f32 1.0, %v2017
    %v2019 = vrcp.pop %v2016
    %v2020 = vmul.f32 1.0, %v2019
    %v2021 = vtanh.pop %v2007
    %v2022 = vtanh.pop %v2008
    %v2023 = vmul.f32 %v2018, %v1841
    %v2024 = vmul.f32 %v2020, %v1842
    %2027 = vrot.lane.b32.xlu0 %v2021, 64
    %v2028 = vpop.permute.xlu0 %2027
    %2029 = vrot.lane.b32.xlu0 %v2022, 64
    %v2030 = vpop.permute.xlu0 %2029
    %v2033 = vmul.f32 %v2018, %v2028
    %v2034 = vmul.f32 %v2020, %v2030
    %2037 = vrot.lane.b32.xlu0 %v2033, 32
    %v2038 = vpop.permute.xlu0 %2037
    %2039 = vrot.lane.b32.xlu0 %v2034, 32
    %v2040 = vpop.permute.xlu0 %2039
    %v2043 = vadd.f32 %v2023, %v2038
    %v2044 = vadd.f32 %v2024, %v2040
    %v2045 = vtanh.pop %v2043
    %v2046 = vtanh.pop %v2044
    %2049 = vrot.lane.b32.xlu0 %v2045, 64
    %v2050 = vpop.permute.xlu0 %2049
    %2051 = vrot.lane.b32.xlu0 %v2046, 64
    %v2052 = vpop.permute.xlu0 %2051
    %v2055 = vmul.f32 %v2018, %v2050
    %v2056 = vmul.f32 %v2020, %v2052
    %2058 = vrot.lane.b32.xlu0 %v2055, 32
    %v2059 = vpop.permute.xlu0 %2058
    %v2060 = vsel %vm369, %v2059, 0
    %2062 = vmatprep.subr.mxu0 0.0
    %2063 = vmatpush1.msra.mxu0 %v628
    %2064 = vmatprep.subr.mxu0 0.0
    %2065 = vmatpush1.msra.mxu0 %v629
    %2066 = vmatprep.subr.mxu0 0.0
    %2067 = vmatpush1.msra.mxu0 %v630
    %2068 = vmatprep.subr.mxu0 0.0
    %2069 = vmatpush1.msra.mxu0 %v631
    %2070 = vmatprep.subr.mxu0 0.0
    %2071 = vmatpush1.msra.mxu0 0.0
    %2072 = vmatprep.subr.mxu0 0.0
    %2073 = vmatpush1.msra.mxu0 0.0
    %2074 = vmatprep.subr.mxu0 0.0
    %2075 = vmatpush1.msra.mxu0 0.0
    %2076 = vmatprep.subr.mxu0 0.0
    %2077 = vmatpush1.msra.mxu0 0.0
    %2078 = vmatprep.subr.mxu0 0.0
    %2079 = vmatpush1.msra.mxu0 0.0
    %2080 = vmatprep.subr.mxu0 0.0
    %2081 = vmatpush1.msra.mxu0 0.0
    %2082 = vmatprep.subr.mxu0 0.0
    %2083 = vmatpush1.msra.mxu0 0.0
    %2084 = vmatprep.subr.mxu0 0.0
    %2085 = vmatpush1.msra.mxu0 0.0
    %2086 = vmatprep.subr.mxu0 0.0
    %2087 = vmatpush1.msra.mxu0 0.0
    %2088 = vmatprep.subr.mxu0 0.0
    %2089 = vmatpush1.msra.mxu0 0.0
    %2090 = vmatprep.subr.mxu0 0.0
    %2091 = vmatpush1.msra.mxu0 0.0
    %2092 = vmatprep.subr.mxu0 0.0
    %2093 = vmatpush1.msra.mxu0 0.0
    %2094 = vmatprep.subr.mxu0 0.0
    %2095 = vmatpush1.msra.mxu0 0.0
    %2096 = vmatprep.subr.mxu0 0.0
    %2097 = vmatpush1.msra.mxu0 0.0
    %2098 = vmatprep.subr.mxu0 0.0
    %2099 = vmatpush1.msra.mxu0 0.0
    %2100 = vmatprep.subr.mxu0 0.0
    %2101 = vmatpush1.msra.mxu0 0.0
    %2102 = vmatprep.subr.mxu0 0.0
    %2103 = vmatpush1.msra.mxu0 0.0
    %2104 = vmatprep.subr.mxu0 0.0
    %2105 = vmatpush1.msra.mxu0 0.0
    %2106 = vmatprep.subr.mxu0 0.0
    %2107 = vmatpush1.msra.mxu0 0.0
    %2108 = vmatprep.subr.mxu0 0.0
    %2109 = vmatpush1.msra.mxu0 0.0
    %2110 = vmatprep.subr.mxu0 0.0
    %2111 = vmatpush1.msra.mxu0 0.0
    %2112 = vmatprep.subr.mxu0 0.0
    %2113 = vmatpush1.msra.mxu0 0.0
    %2114 = vmatprep.subr.mxu0 0.0
    %2115 = vmatpush1.msra.mxu0 0.0
    %2116 = vmatprep.subr.mxu0 0.0
    %2117 = vmatpush1.msra.mxu0 0.0
    %2118 = vmatprep.subr.mxu0 0.0
    %2119 = vmatpush1.msra.mxu0 0.0
    %2120 = vmatprep.subr.mxu0 0.0
    %2121 = vmatpush1.msra.mxu0 0.0
    %2122 = vmatprep.subr.mxu0 0.0
    %2123 = vmatpush1.msra.mxu0 0.0
    %2124 = vmatprep.subr.mxu0 0.0
    %2125 = vmatpush1.msra.mxu0 0.0
    %2126 = vmatprep.mubr.f32.mxu0 0.0
    %2127 = vmatmul.mubr.f32.gmra.mrb[0].mxu0 %v2060
    %v2128 = vpop.f32.mrb[0].mxu0
    %v2129 = vadd.f32 0.0, %v2128
    %v2130 = vpop.f32.mrb[0].mxu0
    %2131 = vdwg.mxu0
    %2133 = vrot.lane.b32.xlu0 %v2056, 32
    %v2134 = vpop.permute.xlu0 %2133
    %v2135 = vsel %vm369, %v2134, 0
    %2137 = vmatprep.subr.mxu0 0.0
    %2138 = vmatpush1.msra.mxu0 %v632
    %2139 = vmatprep.subr.mxu0 0.0
    %2140 = vmatpush1.msra.mxu0 %v633
    %2141 = vmatprep.subr.mxu0 0.0
    %2142 = vmatpush1.msra.mxu0 %v634
    %2143 = vmatprep.subr.mxu0 0.0
    %2144 = vmatpush1.msra.mxu0 %v635
    %2145 = vmatprep.subr.mxu0 0.0
    %2146 = vmatpush1.msra.mxu0 0.0
    %2147 = vmatprep.subr.mxu0 0.0
    %2148 = vmatpush1.msra.mxu0 0.0
    %2149 = vmatprep.subr.mxu0 0.0
    %2150 = vmatpush1.msra.mxu0 0.0
    %2151 = vmatprep.subr.mxu0 0.0
    %2152 = vmatpush1.msra.mxu0 0.0
    %2153 = vmatprep.subr.mxu0 0.0
    %2154 = vmatpush1.msra.mxu0 0.0
    %2155 = vmatprep.subr.mxu0 0.0
    %2156 = vmatpush1.msra.mxu0 0.0
    %2157 = vmatprep.subr.mxu0 0.0
    %2158 = vmatpush1.msra.mxu0 0.0
    %2159 = vmatprep.subr.mxu0 0.0
    %2160 = vmatpush1.msra.mxu0 0.0
    %2161 = vmatprep.subr.mxu0 0.0
    %2162 = vmatpush1.msra.mxu0 0.0
    %2163 = vmatprep.subr.mxu0 0.0
    %2164 = vmatpush1.msra.mxu0 0.0
    %2165 = vmatprep.subr.mxu0 0.0
    %2166 = vmatpush1.msra.mxu0 0.0
    %2167 = vmatprep.subr.mxu0 0.0
    %2168 = vmatpush1.msra.mxu0 0.0
    %2169 = vmatprep.subr.mxu0 0.0
    %2170 = vmatpush1.msra.mxu0 0.0
    %2171 = vmatprep.subr.mxu0 0.0
    %2172 = vmatpush1.msra.mxu0 0.0
    %2173 = vmatprep.subr.mxu0 0.0
    %2174 = vmatpush1.msra.mxu0 0.0
    %2175 = vmatprep.subr.mxu0 0.0
    %2176 = vmatpush1.msra.mxu0 0.0
    %2177 = vmatprep.subr.mxu0 0.0
    %2178 = vmatpush1.msra.mxu0 0.0
    %2179 = vmatprep.subr.mxu0 0.0
    %2180 = vmatpush1.msra.mxu0 0.0
    %2181 = vmatprep.subr.mxu0 0.0
    %2182 = vmatpush1.msra.mxu0 0.0
    %2183 = vmatprep.subr.mxu0 0.0
    %2184 = vmatpush1.msra.mxu0 0.0
    %2185 = vmatprep.subr.mxu0 0.0
    %2186 = vmatpush1.msra.mxu0 0.0
    %2187 = vmatprep.subr.mxu0 0.0
    %2188 = vmatpush1.msra.mxu0 0.0
    %2189 = vmatprep.subr.mxu0 0.0
    %2190 = vmatpush1.msra.mxu0 0.0
    %2191 = vmatprep.subr.mxu0 0.0
    %2192 = vmatpush1.msra.mxu0 0.0
    %2193 = vmatprep.subr.mxu0 0.0
    %2194 = vmatpush1.msra.mxu0 0.0
    %2195 = vmatprep.subr.mxu0 0.0
    %2196 = vmatpush1.msra.mxu0 0.0
    %2197 = vmatprep.subr.mxu0 0.0
    %2198 = vmatpush1.msra.mxu0 0.0
    %2199 = vmatprep.subr.mxu0 0.0
    %2200 = vmatpush1.msra.mxu0 0.0
    %2201 = vmatprep.mubr.f32.mxu0 0.0
    %2202 = vmatmul.mubr.f32.gmra.mrb[0].mxu0 %v2135
    %v2203 = vpop.f32.mrb[0].mxu0
    %v2204 = vadd.f32 0.0, %v2203
    %v2205 = vpop.f32.mrb[0].mxu0
    %2206 = vdwg.mxu0
    %v2207 = vadd.f32 %v496, %v2129
    %v2208 = vadd.f32 %v625, %v2204
    %v2209 = vadd.f32 %v2207, %v788
    %v2210 = vadd.f32 %v2208, %v792
    %v2211 = vxor.u32 %v2209, 2147483648
    %v2212 = vxor.u32 %v2210, 2147483648
    %v2213 = vmul.f32 %v2211, 1.442695
    %v2214 = vpow.pop %v2213
    %v2215 = vmul.f32 %v2212, 1.442695
    %v2216 = vpow.pop %v2215
    %v2217 = vadd.f32 %v2214, 1.0
    %v2218 = vadd.f32 %v2216, 1.0
    %v2219 = vrcp.pop %v2217
    %v2220 = vmul.f32 1.0, %v2219
    %v2221 = vrcp.pop %v2218
    %v2222 = vmul.f32 1.0, %v2221
    %v2223 = vtanh.pop %v2209
    %v2224 = vtanh.pop %v2210
    %v2225 = vmul.f32 %v2220, %v2043
    %v2226 = vmul.f32 %v2222, %v2044
    %2229 = vrot.lane.b32.xlu0 %v2223, 64
    %v2230 = vpop.permute.xlu0 %2229
    %2231 = vrot.lane.b32.xlu0 %v2224, 64
    %v2232 = vpop.permute.xlu0 %2231
    %v2235 = vmul.f32 %v2220, %v2230
    %v2236 = vmul.f32 %v2222, %v2232
    %2239 = vrot.lane.b32.xlu0 %v2235, 32
    %v2240 = vpop.permute.xlu0 %2239
    %2241 = vrot.lane.b32.xlu0 %v2236, 32
    %v2242 = vpop.permute.xlu0 %2241
    %v2245 = vadd.f32 %v2225, %v2240
    %v2246 = vadd.f32 %v2226, %v2242
    %v2247 = vtanh.pop %v2245
    %v2248 = vtanh.pop %v2246
    %2251 = vrot.lane.b32.xlu0 %v2247, 64
    %v2252 = vpop.permute.xlu0 %2251
    %2253 = vrot.lane.b32.xlu0 %v2248, 64
    %v2254 = vpop.permute.xlu0 %2253
    %v2257 = vmul.f32 %v2220, %v2252
    %v2258 = vmul.f32 %v2222, %v2254
    %v2259 = vld [vmem:[%s1] sm:$0xff]
    %2260 = vset.pattern.permute.xlu0 0
    %2261 = vperm.xlu0 %2260, %v2259
    %v2262 = vpop.permute.xlu0 %2261
    %vm2263 = vcmp.eq.s32.totalorder %v2262, %v62
    %v2264 = vsel %vm2263, 1, 0
    %v2265 = vcvt.s32.f32 %v2264
    %v2266 = vld [vmem:[%s3] sm:$0xff]
    %v2267 = vld [vmem:[%s3 + $0x8] sm:$0xff]
    %vm2268 = vcmask 130048
    %v2270 = vsel %vm2268, %v2265, 0
    %2272 = vmatprep.subr.mxu0 0.0
    %2273 = vmatpush1.msra.mxu0 %v2266
    %2274 = vmatprep.subr.mxu0 0.0
    %2275 = vmatpush1.msra.mxu0 %v2267
    %2276 = vmatprep.subr.mxu0 0.0
    %2277 = vmatpush1.msra.mxu0 0.0
    %2278 = vmatprep.subr.mxu0 0.0
    %2279 = vmatpush1.msra.mxu0 0.0
    %2280 = vmatprep.subr.mxu0 0.0
    %2281 = vmatpush1.msra.mxu0 0.0
    %2282 = vmatprep.subr.mxu0 0.0
    %2283 = vmatpush1.msra.mxu0 0.0
    %2284 = vmatprep.subr.mxu0 0.0
    %2285 = vmatpush1.msra.mxu0 0.0
    %2286 = vmatprep.subr.mxu0 0.0
    %2287 = vmatpush1.msra.mxu0 0.0
    %2288 = vmatprep.subr.mxu0 0.0
    %2289 = vmatpush1.msra.mxu0 0.0
    %2290 = vmatprep.subr.mxu0 0.0
    %2291 = vmatpush1.msra.mxu0 0.0
    %2292 = vmatprep.subr.mxu0 0.0
    %2293 = vmatpush1.msra.mxu0 0.0
    %2294 = vmatprep.subr.mxu0 0.0
    %2295 = vmatpush1.msra.mxu0 0.0
    %2296 = vmatprep.subr.mxu0 0.0
    %2297 = vmatpush1.msra.mxu0 0.0
    %2298 = vmatprep.subr.mxu0 0.0
    %2299 = vmatpush1.msra.mxu0 0.0
    %2300 = vmatprep.subr.mxu0 0.0
    %2301 = vmatpush1.msra.mxu0 0.0
    %2302 = vmatprep.subr.mxu0 0.0
    %2303 = vmatpush1.msra.mxu0 0.0
    %2304 = vmatprep.subr.mxu0 0.0
    %2305 = vmatpush1.msra.mxu0 0.0
    %2306 = vmatprep.subr.mxu0 0.0
    %2307 = vmatpush1.msra.mxu0 0.0
    %2308 = vmatprep.subr.mxu0 0.0
    %2309 = vmatpush1.msra.mxu0 0.0
    %2310 = vmatprep.subr.mxu0 0.0
    %2311 = vmatpush1.msra.mxu0 0.0
    %2312 = vmatprep.subr.mxu0 0.0
    %2313 = vmatpush1.msra.mxu0 0.0
    %2314 = vmatprep.subr.mxu0 0.0
    %2315 = vmatpush1.msra.mxu0 0.0
    %2316 = vmatprep.subr.mxu0 0.0
    %2317 = vmatpush1.msra.mxu0 0.0
    %2318 = vmatprep.subr.mxu0 0.0
    %2319 = vmatpush1.msra.mxu0 0.0
    %2320 = vmatprep.subr.mxu0 0.0
    %2321 = vmatpush1.msra.mxu0 0.0
    %2322 = vmatprep.subr.mxu0 0.0
    %2323 = vmatpush1.msra.mxu0 0.0
    %2324 = vmatprep.subr.mxu0 0.0
    %2325 = vmatpush1.msra.mxu0 0.0
    %2326 = vmatprep.subr.mxu0 0.0
    %2327 = vmatpush1.msra.mxu0 0.0
    %2328 = vmatprep.subr.mxu0 0.0
    %2329 = vmatpush1.msra.mxu0 0.0
    %2330 = vmatprep.subr.mxu0 0.0
    %2331 = vmatpush1.msra.mxu0 0.0
    %2332 = vmatprep.subr.mxu0 0.0
    %2333 = vmatpush1.msra.mxu0 0.0
    %2334 = vmatprep.subr.mxu0 0.0
    %2335 = vmatpush1.msra.mxu0 0.0
    %2336 = vmatprep.mubr.f32.mxu0 0.0
    %2337 = vmatmul.mubr.f32.gmra.mrb[0].mxu0 %v2270
    %v2338 = vpop.f32.mrb[0].mxu0
    %v2339 = vadd.f32 0.0, %v2338
    %v2340 = vpop.f32.mrb[0].mxu0
    %2341 = vdwg.mxu0
    %v2342 = vld [vmem:[%s7] sm:$0xff]
    %v2343 = vld [vmem:[%s7 + $0x8] sm:$0xff]
    %v2344 = vld [vmem:[%s7 + $0x10] sm:$0xff]
    %v2345 = vld [vmem:[%s7 + $0x18] sm:$0xff]
    %v2346 = vld [vmem:[%s8] sm:$0xff]
    %v2347 = vld [vmem:[%s8 + $0x8] sm:$0xff]
    %v2348 = vld [vmem:[%s8 + $0x10] sm:$0xff]
    %v2349 = vld [vmem:[%s8 + $0x18] sm:$0xff]
    %2351 = vrot.lane.b32.xlu0 %v2258, 32
    %v2352 = vpop.permute.xlu0 %2351
    %v2353 = vsel %vm369, %v2352, 0
    %2355 = vmatprep.subr.mxu0 0.0
    %2356 = vmatpush1.msra.mxu0 %v2346
    %2357 = vmatprep.subr.mxu0 0.0
    %2358 = vmatpush1.msra.mxu0 %v2347
    %2359 = vmatprep.subr.mxu0 0.0
    %2360 = vmatpush1.msra.mxu0 %v2348
    %2361 = vmatprep.subr.mxu0 0.0
    %2362 = vmatpush1.msra.mxu0 %v2349
    %2363 = vmatprep.subr.mxu0 0.0
    %2364 = vmatpush1.msra.mxu0 0.0
    %2365 = vmatprep.subr.mxu0 0.0
    %2366 = vmatpush1.msra.mxu0 0.0
    %2367 = vmatprep.subr.mxu0 0.0
    %2368 = vmatpush1.msra.mxu0 0.0
    %2369 = vmatprep.subr.mxu0 0.0
    %2370 = vmatpush1.msra.mxu0 0.0
    %2371 = vmatprep.subr.mxu0 0.0
    %2372 = vmatpush1.msra.mxu0 0.0
    %2373 = vmatprep.subr.mxu0 0.0
    %2374 = vmatpush1.msra.mxu0 0.0
    %2375 = vmatprep.subr.mxu0 0.0
    %2376 = vmatpush1.msra.mxu0 0.0
    %2377 = vmatprep.subr.mxu0 0.0
    %2378 = vmatpush1.msra.mxu0 0.0
    %2379 = vmatprep.subr.mxu0 0.0
    %2380 = vmatpush1.msra.mxu0 0.0
    %2381 = vmatprep.subr.mxu0 0.0
    %2382 = vmatpush1.msra.mxu0 0.0
    %2383 = vmatprep.subr.mxu0 0.0
    %2384 = vmatpush1.msra.mxu0 0.0
    %2385 = vmatprep.subr.mxu0 0.0
    %2386 = vmatpush1.msra.mxu0 0.0
    %2387 = vmatprep.subr.mxu0 0.0
    %2388 = vmatpush1.msra.mxu0 0.0
    %2389 = vmatprep.subr.mxu0 0.0
    %2390 = vmatpush1.msra.mxu0 0.0
    %2391 = vmatprep.subr.mxu0 0.0
    %2392 = vmatpush1.msra.mxu0 0.0
    %2393 = vmatprep.subr.mxu0 0.0
    %2394 = vmatpush1.msra.mxu0 0.0
    %2395 = vmatprep.subr.mxu0 0.0
    %2396 = vmatpush1.msra.mxu0 0.0
    %2397 = vmatprep.subr.mxu0 0.0
    %2398 = vmatpush1.msra.mxu0 0.0
    %2399 = vmatprep.subr.mxu0 0.0
    %2400 = vmatpush1.msra.mxu0 0.0
    %2401 = vmatprep.subr.mxu0 0.0
    %2402 = vmatpush1.msra.mxu0 0.0
    %2403 = vmatprep.subr.mxu0 0.0
    %2404 = vmatpush1.msra.mxu0 0.0
    %2405 = vmatprep.subr.mxu0 0.0
    %2406 = vmatpush1.msra.mxu0 0.0
    %2407 = vmatprep.subr.mxu0 0.0
    %2408 = vmatpush1.msra.mxu0 0.0
    %2409 = vmatprep.subr.mxu0 0.0
    %2410 = vmatpush1.msra.mxu0 0.0
    %2411 = vmatprep.subr.mxu0 0.0
    %2412 = vmatpush1.msra.mxu0 0.0
    %2413 = vmatprep.subr.mxu0 0.0
    %2414 = vmatpush1.msra.mxu0 0.0
    %2415 = vmatprep.subr.mxu0 0.0
    %2416 = vmatpush1.msra.mxu0 0.0
    %2417 = vmatprep.subr.mxu0 0.0
    %2418 = vmatpush1.msra.mxu0 0.0
    %2419 = vmatprep.mubr.f32.mxu0 0.0
    %2420 = vmatmul.mubr.f32.gmra.mrb[0].mxu0 %v2353
    %v2421 = vpop.f32.mrb[0].mxu0
    %v2422 = vadd.f32 0.0, %v2421
    %v2423 = vpop.f32.mrb[0].mxu0
    %2424 = vdwg.mxu0
    %2426 = vrot.lane.b32.xlu0 %v2257, 32
    %v2427 = vpop.permute.xlu0 %2426
    %v2428 = vsel %vm369, %v2427, 0
    %2430 = vmatprep.subr.mxu0 0.0
    %2431 = vmatpush1.msra.mxu0 %v2342
    %2432 = vmatprep.subr.mxu0 0.0
    %2433 = vmatpush1.msra.mxu0 %v2343
    %2434 = vmatprep.subr.mxu0 0.0
    %2435 = vmatpush1.msra.mxu0 %v2344
    %2436 = vmatprep.subr.mxu0 0.0
    %2437 = vmatpush1.msra.mxu0 %v2345
    %2438 = vmatprep.subr.mxu0 0.0
    %2439 = vmatpush1.msra.mxu0 0.0
    %2440 = vmatprep.subr.mxu0 0.0
    %2441 = vmatpush1.msra.mxu0 0.0
    %2442 = vmatprep.subr.mxu0 0.0
    %2443 = vmatpush1.msra.mxu0 0.0
    %2444 = vmatprep.subr.mxu0 0.0
    %2445 = vmatpush1.msra.mxu0 0.0
    %2446 = vmatprep.subr.mxu0 0.0
    %2447 = vmatpush1.msra.mxu0 0.0
    %2448 = vmatprep.subr.mxu0 0.0
    %2449 = vmatpush1.msra.mxu0 0.0
    %2450 = vmatprep.subr.mxu0 0.0
    %2451 = vmatpush1.msra.mxu0 0.0
    %2452 = vmatprep.subr.mxu0 0.0
    %2453 = vmatpush1.msra.mxu0 0.0
    %2454 = vmatprep.subr.mxu0 0.0
    %2455 = vmatpush1.msra.mxu0 0.0
    %2456 = vmatprep.subr.mxu0 0.0
    %2457 = vmatpush1.msra.mxu0 0.0
    %2458 = vmatprep.subr.mxu0 0.0
    %2459 = vmatpush1.msra.mxu0 0.0
    %2460 = vmatprep.subr.mxu0 0.0
    %2461 = vmatpush1.msra.mxu0 0.0
    %2462 = vmatprep.subr.mxu0 0.0
    %2463 = vmatpush1.msra.mxu0 0.0
    %2464 = vmatprep.subr.mxu0 0.0
    %2465 = vmatpush1.msra.mxu0 0.0
    %2466 = vmatprep.subr.mxu0 0.0
    %2467 = vmatpush1.msra.mxu0 0.0
    %2468 = vmatprep.subr.mxu0 0.0
    %2469 = vmatpush1.msra.mxu0 0.0
    %2470 = vmatprep.subr.mxu0 0.0
    %2471 = vmatpush1.msra.mxu0 0.0
    %2472 = vmatprep.subr.mxu0 0.0
    %2473 = vmatpush1.msra.mxu0 0.0
    %2474 = vmatprep.subr.mxu0 0.0
    %2475 = vmatpush1.msra.mxu0 0.0
    %2476 = vmatprep.subr.mxu0 0.0
    %2477 = vmatpush1.msra.mxu0 0.0
    %2478 = vmatprep.subr.mxu0 0.0
    %2479 = vmatpush1.msra.mxu0 0.0
    %2480 = vmatprep.subr.mxu0 0.0
    %2481 = vmatpush1.msra.mxu0 0.0
    %2482 = vmatprep.subr.mxu0 0.0
    %2483 = vmatpush1.msra.mxu0 0.0
    %2484 = vmatprep.subr.mxu0 0.0
    %2485 = vmatpush1.msra.mxu0 0.0
    %2486 = vmatprep.subr.mxu0 0.0
    %2487 = vmatpush1.msra.mxu0 0.0
    %2488 = vmatprep.subr.mxu0 0.0
    %2489 = vmatpush1.msra.mxu0 0.0
    %2490 = vmatprep.subr.mxu0 0.0
    %2491 = vmatpush1.msra.mxu0 0.0
    %2492 = vmatprep.subr.mxu0 0.0
    %2493 = vmatpush1.msra.mxu0 0.0
    %2494 = vmatprep.mubr.f32.mxu0 0.0
    %2495 = vmatmul.mubr.f32.gmra.mrb[0].mxu0 %v2428
    %v2496 = vpop.f32.mrb[0].mxu0
    %v2497 = vadd.f32 %v2422, %v2496
    %v2498 = vpop.f32.mrb[0].mxu0
    %2499 = vdwg.mxu0
    %v2500 = vld [vmem:[%s9] sm:$0xff]
    %v2501 = vld [vmem:[%s9 + $0x8] sm:$0xff]
    %v2502 = vld [vmem:[%s9 + $0x10] sm:$0xff]
    %v2503 = vld [vmem:[%s9 + $0x18] sm:$0xff]
    %v2505 = vsel %vm369, %v2339, 0
    %2507 = vmatprep.subr.mxu0 0.0
    %2508 = vmatpush1.msra.mxu0 %v2500
    %2509 = vmatprep.subr.mxu0 0.0
    %2510 = vmatpush1.msra.mxu0 %v2501
    %2511 = vmatprep.subr.mxu0 0.0
    %2512 = vmatpush1.msra.mxu0 %v2502
    %2513 = vmatprep.subr.mxu0 0.0
    %2514 = vmatpush1.msra.mxu0 %v2503
    %2515 = vmatprep.subr.mxu0 0.0
    %2516 = vmatpush1.msra.mxu0 0.0
    %2517 = vmatprep.subr.mxu0 0.0
    %2518 = vmatpush1.msra.mxu0 0.0
    %2519 = vmatprep.subr.mxu0 0.0
    %2520 = vmatpush1.msra.mxu0 0.0
    %2521 = vmatprep.subr.mxu0 0.0
    %2522 = vmatpush1.msra.mxu0 0.0
    %2523 = vmatprep.subr.mxu0 0.0
    %2524 = vmatpush1.msra.mxu0 0.0
    %2525 = vmatprep.subr.mxu0 0.0
    %2526 = vmatpush1.msra.mxu0 0.0
    %2527 = vmatprep.subr.mxu0 0.0
    %2528 = vmatpush1.msra.mxu0 0.0
    %2529 = vmatprep.subr.mxu0 0.0
    %2530 = vmatpush1.msra.mxu0 0.0
    %2531 = vmatprep.subr.mxu0 0.0
    %2532 = vmatpush1.msra.mxu0 0.0
    %2533 = vmatprep.subr.mxu0 0.0
    %2534 = vmatpush1.msra.mxu0 0.0
    %2535 = vmatprep.subr.mxu0 0.0
    %2536 = vmatpush1.msra.mxu0 0.0
    %2537 = vmatprep.subr.mxu0 0.0
    %2538 = vmatpush1.msra.mxu0 0.0
    %2539 = vmatprep.subr.mxu0 0.0
    %2540 = vmatpush1.msra.mxu0 0.0
    %2541 = vmatprep.subr.mxu0 0.0
    %2542 = vmatpush1.msra.mxu0 0.0
    %2543 = vmatprep.subr.mxu0 0.0
    %2544 = vmatpush1.msra.mxu0 0.0
    %2545 = vmatprep.subr.mxu0 0.0
    %2546 = vmatpush1.msra.mxu0 0.0
    %2547 = vmatprep.subr.mxu0 0.0
    %2548 = vmatpush1.msra.mxu0 0.0
    %2549 = vmatprep.subr.mxu0 0.0
    %2550 = vmatpush1.msra.mxu0 0.0
    %2551 = vmatprep.subr.mxu0 0.0
    %2552 = vmatpush1.msra.mxu0 0.0
    %2553 = vmatprep.subr.mxu0 0.0
    %2554 = vmatpush1.msra.mxu0 0.0
    %2555 = vmatprep.subr.mxu0 0.0
    %2556 = vmatpush1.msra.mxu0 0.0
    %2557 = vmatprep.subr.mxu0 0.0
    %2558 = vmatpush1.msra.mxu0 0.0
    %2559 = vmatprep.subr.mxu0 0.0
    %2560 = vmatpush1.msra.mxu0 0.0
    %2561 = vmatprep.subr.mxu0 0.0
    %2562 = vmatpush1.msra.mxu0 0.0
    %2563 = vmatprep.subr.mxu0 0.0
    %2564 = vmatpush1.msra.mxu0 0.0
    %2565 = vmatprep.subr.mxu0 0.0
    %2566 = vmatpush1.msra.mxu0 0.0
    %2567 = vmatprep.subr.mxu0 0.0
    %2568 = vmatpush1.msra.mxu0 0.0
    %2569 = vmatprep.subr.mxu0 0.0
    %2570 = vmatpush1.msra.mxu0 0.0
    %2571 = vmatprep.mubr.f32.mxu0 0.0
    %2572 = vmatmul.mubr.f32.gmra.mrb[0].mxu0 %v2505
    %v2573 = vpop.f32.mrb[0].mxu0
    %v2574 = vadd.f32 0.0, %v2573
    %v2575 = vpop.f32.mrb[0].mxu0
    %2576 = vdwg.mxu0
    %v2577 = vadd.f32 %v2497, %v2574
    %v2578 = vld [vmem:[%s10] sm:$0x1]
    %v2580 = vlaneseq
    %v2581 = vshrl.u32 %v2580, 7
    %v2582 = vsub.s32 0, %v2581
    %v2583 = vrot.slane %v2578, %v2582
    %v2585 = vadd.f32 %v2577, %v2583
    %v2586 = vmax.f32 %v2585, 0.0
    %v2587 = vld [vmem:[%s11] sm:$0xff]
    %v2588 = vld [vmem:[%s11 + $0x8] sm:$0xff]
    %v2589 = vld [vmem:[%s11 + $0x10] sm:$0xff]
    %v2590 = vld [vmem:[%s11 + $0x18] sm:$0xff]
    %v2591 = vld [vmem:[%s12] sm:$0x1]
    %v2593 = vlaneseq
    %v2594 = vshrl.u32 %v2593, 7
    %v2595 = vsub.s32 0, %v2594
    %v2596 = vrot.slane %v2591, %v2595
    %v2599 = vsel %vm369, %v2586, 0
    %2601 = vmatprep.subr.mxu0 0.0
    %2602 = vmatpush1.msra.mxu0 %v2587
    %2603 = vmatprep.subr.mxu0 0.0
    %2604 = vmatpush1.msra.mxu0 %v2588
    %2605 = vmatprep.subr.mxu0 0.0
    %2606 = vmatpush1.msra.mxu0 %v2589
    %2607 = vmatprep.subr.mxu0 0.0
    %2608 = vmatpush1.msra.mxu0 %v2590
    %2609 = vmatprep.subr.mxu0 0.0
    %2610 = vmatpush1.msra.mxu0 0.0
    %2611 = vmatprep.subr.mxu0 0.0
    %2612 = vmatpush1.msra.mxu0 0.0
    %2613 = vmatprep.subr.mxu0 0.0
    %2614 = vmatpush1.msra.mxu0 0.0
    %2615 = vmatprep.subr.mxu0 0.0
    %2616 = vmatpush1.msra.mxu0 0.0
    %2617 = vmatprep.subr.mxu0 0.0
    %2618 = vmatpush1.msra.mxu0 0.0
    %2619 = vmatprep.subr.mxu0 0.0
    %2620 = vmatpush1.msra.mxu0 0.0
    %2621 = vmatprep.subr.mxu0 0.0
    %2622 = vmatpush1.msra.mxu0 0.0
    %2623 = vmatprep.subr.mxu0 0.0
    %2624 = vmatpush1.msra.mxu0 0.0
    %2625 = vmatprep.subr.mxu0 0.0
    %2626 = vmatpush1.msra.mxu0 0.0
    %2627 = vmatprep.subr.mxu0 0.0
    %2628 = vmatpush1.msra.mxu0 0.0
    %2629 = vmatprep.subr.mxu0 0.0
    %2630 = vmatpush1.msra.mxu0 0.0
    %2631 = vmatprep.subr.mxu0 0.0
    %2632 = vmatpush1.msra.mxu0 0.0
    %2633 = vmatprep.subr.mxu0 0.0
    %2634 = vmatpush1.msra.mxu0 0.0
    %2635 = vmatprep.subr.mxu0 0.0
    %2636 = vmatpush1.msra.mxu0 0.0
    %2637 = vmatprep.subr.mxu0 0.0
    %2638 = vmatpush1.msra.mxu0 0.0
    %2639 = vmatprep.subr.mxu0 0.0
    %2640 = vmatpush1.msra.mxu0 0.0
    %2641 = vmatprep.subr.mxu0 0.0
    %2642 = vmatpush1.msra.mxu0 0.0
    %2643 = vmatprep.subr.mxu0 0.0
    %2644 = vmatpush1.msra.mxu0 0.0
    %2645 = vmatprep.subr.mxu0 0.0
    %2646 = vmatpush1.msra.mxu0 0.0
    %2647 = vmatprep.subr.mxu0 0.0
    %2648 = vmatpush1.msra.mxu0 0.0
    %2649 = vmatprep.subr.mxu0 0.0
    %2650 = vmatpush1.msra.mxu0 0.0
    %2651 = vmatprep.subr.mxu0 0.0
    %2652 = vmatpush1.msra.mxu0 0.0
    %2653 = vmatprep.subr.mxu0 0.0
    %2654 = vmatpush1.msra.mxu0 0.0
    %2655 = vmatprep.subr.mxu0 0.0
    %2656 = vmatpush1.msra.mxu0 0.0
    %2657 = vmatprep.subr.mxu0 0.0
    %2658 = vmatpush1.msra.mxu0 0.0
    %2659 = vmatprep.subr.mxu0 0.0
    %2660 = vmatpush1.msra.mxu0 0.0
    %2661 = vmatprep.subr.mxu0 0.0
    %2662 = vmatpush1.msra.mxu0 0.0
    %2663 = vmatprep.subr.mxu0 0.0
    %2664 = vmatpush1.msra.mxu0 0.0
    %2665 = vmatprep.mubr.f32.mxu0 0.0
    %2666 = vmatmul.mubr.f32.gmra.mrb[0].mxu0 %v2599
    %v2667 = vpop.f32.mrb[0].mxu0
    %v2668 = vadd.f32 %v2596, %v2667
    %v2669 = vpop.f32.mrb[0].mxu0
    %2670 = vdwg.mxu0
    %2671 = vst [vmem:[#allocation2] sm:$0xff] %v2668
    // Predicated region
    $region54: #{w2v_error_model_forward.1} parent=1 // pred_check
      _
    $region55: #{w2v_error_model_forward.1} parent=1 // pred_check_branch
      %2673 = sbr.rel (0) target = $region57
    $region56: #{w2v_error_model_forward.1} parent=1 // pred_region
      %s2675 = ssub.s32 128, 128
      %2676 = vsyncadd [#allocation3], %s2675
      %s2678 = sshll.u32 [#allocation2], 4
      %s2679 = int_to_ptr.vmem [resolvable:$true] %s2678
      %2681 = dma.vmem_to_hbm [thread:$0]  %s2679, 128, %s13, [#allocation3]
    $region57: #{w2v_error_model_forward.1} parent=1 // pred_fallthru
      _
    // Predicated region
    $region58: #{w2v_error_model_forward.1} parent=1 // pred_check
      _
    $region59: #{w2v_error_model_forward.1} parent=1 // pred_check_branch
      %2683 = sbr.rel (0) target = $region61
    $region60: #{w2v_error_model_forward.1} parent=1 // pred_region
      %2684 = dma.done [#allocation3], 128
    $region61: #{w2v_error_model_forward.1} parent=1 // pred_fallthru
      _
    %2685 = vsyncpa [#allocation3], 1

</llo_original>
